<compile_context>
chip_gen: v7x
topology: tpu7x:2x2x1
jax: 0.10.0
libtpu: 0.0.40
codegen_flags: <defaults>
</compile_context>

<pallas_src>
import jax
import jax.numpy as jnp
import numpy as np
from jax.experimental import pallas as pl
from jax.experimental.pallas import tpu as pltpu

LANE = 128
SUBLANE = 8


def _round_up(x, m):
    return ((x + m - 1) // m) * m


# ----------------------------------------------------------------------------
# Pallas kernel: one graph per grid step.
#   inv_n_ref: (G,)         f32  scalar-prefetch (SMEM): 1 / n_g
#   adj_ref  : (Np, Np)     bf16 this graph's normalized adjacency block
#   x_ref    : (Np, D)      bf16 this graph's node features (padded)
#   pool_ref : (8, Np)      f32  row 0 = 0/1 validity indicator, rows 1-7 = 0
#   w_ref    : (5, D, D)    bf16 packed weights [w1, w2, w3, w_emb, w_cls]
#   b_ref    : (8, D)       f32  packed biases  [b1, b2, b3, b_emb, b_cls, 0..]
#   out_ref  : (8, D)       f32  row 0 = logits for this graph
#   emb_ref  : (8, D)       f32  row 0 = embedding for this graph
# ----------------------------------------------------------------------------
def odor_gnn_kernel(inv_n_ref, adj_ref, x_ref, pool_ref, w_ref, b_ref,
                    out_ref, emb_ref):
    g = pl.program_id(0)

    def gcn_relu(h_bf16, i):
        # GCNConv: A_hat @ (H @ W) + b ; bf16 MXU operands, f32 accumulation.
        # bf16 cast fused into the ReLU return (no f32 h kept between layers).
        hw = jnp.dot(h_bf16, w_ref[i], preferred_element_type=jnp.float32)
        agg = jnp.dot(adj_ref[...], hw.astype(jnp.bfloat16),
                      preferred_element_type=jnp.float32)
        return jnp.maximum(agg + b_ref[i:i + 1, :], 0.0).astype(jnp.bfloat16)

    h = gcn_relu(x_ref[...], 0)
    # F.dropout(p=0.2, training=False) -> identity in eval mode.
    h = gcn_relu(h, 1)
    h = gcn_relu(h, 2)

    # Masked mean pool.  Padded node rows of h equal relu(bias) != 0, so they
    # must be masked: row 0 of pool_ref is an exact 0/1 indicator (cast to
    # bf16 is exact), the sum runs on the MXU, and the 1/n_g scale is applied
    # in f32 from SMEM.
    pooled = jnp.dot(pool_ref[...].astype(jnp.bfloat16), h,
                     preferred_element_type=jnp.float32) * inv_n_ref[g]

    emb = jnp.dot(pooled.astype(jnp.bfloat16), w_ref[3],
                  preferred_element_type=jnp.float32) + b_ref[3:4, :]
    out = jnp.dot(emb.astype(jnp.bfloat16), w_ref[4],
                  preferred_element_type=jnp.float32) + b_ref[4:5, :]

    emb_ref[...] = emb                                  # lane-dense f32 stores
    out_ref[...] = out


# ----------------------------------------------------------------------------
# Wrapper: pad / pack parameters, call the kernel over the graph grid,
# slice outputs back.  Jittable (all shapes static).
# ----------------------------------------------------------------------------
def odor_gnn_forward(inv_counts, adj_blocks, x_blocks, pool_ind, params):
    (w1, b1, w2, b2, w3, b3, we, be, wc, bc) = params
    G, Np, _ = adj_blocks.shape
    F_in, H = w1.shape
    E = we.shape[1]
    C = wc.shape[1]
    D = _round_up(max(F_in, H, E, C), LANE)   # unified lane-dense width

    adj_p = adj_blocks.astype(jnp.bfloat16)                        # (G, Np, Np)
    x_p = jnp.pad(x_blocks, ((0, 0), (0, 0), (0, D - F_in))
                  ).astype(jnp.bfloat16)                           # (G, Np, D)
    pool_p = pool_ind.astype(jnp.float32)                          # (G, 8, Np)

    def pad2(a, r, c):
        return jnp.pad(a, ((0, r - a.shape[0]), (0, c - a.shape[1])))

    # Pack the five weight matrices into one contiguous bf16 buffer.
    w_stack = jnp.stack([pad2(w, D, D) for w in (w1, w2, w3, we, wc)]
                        ).astype(jnp.bfloat16)                     # (5, D, D)

    # Pack the five biases into one (8, D) f32 buffer (rows 5..7 = pad).
    def pad_bias(b):
        b = b.reshape(-1)
        return jnp.pad(b, (0, D - b.shape[0]))
    b_stack = jnp.zeros((SUBLANE, D), jnp.float32).at[:5].set(
        jnp.stack([pad_bias(b) for b in (b1, b2, b3, be, bc)]))    # (8, D)

    # Scoped-VMEM budget: double-buffered per-step blocks + f32 temporaries.
    block_bytes = (Np * Np * 2 + Np * D * 2 + SUBLANE * Np * 4
                   + 5 * D * D * 2 + SUBLANE * D * 4 + 2 * SUBLANE * D * 4)
    vmem_limit = int(min(64 << 20,
                         max(2 * block_bytes + 6 * Np * D * 4, 16 << 20)))

    flops = 2 * G * (3 * (Np * D * D + Np * Np * D)    # 3x GCN layers
                     + SUBLANE * Np * D                # masked mean pool
                     + 2 * SUBLANE * D * D)            # embedding + classifier
    bytes_accessed = ((adj_p.size + x_p.size + w_stack.size) * 2
                      + (pool_p.size + b_stack.size) * 4
                      + 2 * G * SUBLANE * D * 4)

    grid_spec = pltpu.PrefetchScalarGridSpec(
        num_scalar_prefetch=1,
        grid=(G,),
        in_specs=[
            pl.BlockSpec((None, Np, Np), lambda g, inv: (g, 0, 0)),      # adj
            pl.BlockSpec((None, Np, D), lambda g, inv: (g, 0, 0)),       # x
            pl.BlockSpec((None, SUBLANE, Np), lambda g, inv: (g, 0, 0)),  # pool
            pl.BlockSpec((5, D, D), lambda g, inv: (0, 0, 0)),           # W
            pl.BlockSpec((SUBLANE, D), lambda g, inv: (0, 0)),           # b
        ],
        out_specs=(
            pl.BlockSpec((None, SUBLANE, D), lambda g, inv: (g, 0, 0)),
            pl.BlockSpec((None, SUBLANE, D), lambda g, inv: (g, 0, 0)),
        ),
    )

    out_p, emb_p = pl.pallas_call(
        odor_gnn_kernel,
        out_shape=(
            jax.ShapeDtypeStruct((G, SUBLANE, D), jnp.float32),
            jax.ShapeDtypeStruct((G, SUBLANE, D), jnp.float32),
        ),
        grid_spec=grid_spec,
        compiler_params=pltpu.CompilerParams(
            dimension_semantics=("parallel",),      # graphs split across TCs
            vmem_limit_bytes=vmem_limit),
        cost_estimate=pl.CostEstimate(flops=flops, transcendentals=0,
                                      bytes_accessed=bytes_accessed),
    )(inv_counts, adj_p, x_p, pool_p, w_stack, b_stack)

    return out_p[:, 0, :C], emb_p[:, 0, :E]


# ----------------------------------------------------------------------------
# Host-side prep: per-graph (block-diagonal) padded operands.
# Graphs are disconnected components, so restricting the globally normalized
# D^-1/2 (A+I) D^-1/2 to each graph's nodes is exact.
# ----------------------------------------------------------------------------
def prepare_blocked_inputs(x, edge_index, batch, num_graphs):
    x_np = np.asarray(x, np.float32)
    ei = np.asarray(edge_index)
    batch_np = np.asarray(batch)
    N, F_in = x_np.shape

    a = np.zeros((N, N), np.float32)
    np.add.at(a, (ei[1], ei[0]), 1.0)
    a += np.eye(N, dtype=np.float32)                  # self loops
    deg = a.sum(axis=1)
    dinv = np.where(deg > 0, 1.0 / np.sqrt(deg), 0.0)
    a_norm = dinv[:, None] * a * dinv[None, :]

    counts = np.array([int((batch_np == g).sum()) for g in range(num_graphs)])
    Np = _round_up(max(int(counts.max()), 1), LANE)   # lane-dense per-graph dim

    adj_blocks = np.zeros((num_graphs, Np, Np), np.float32)
    x_blocks = np.zeros((num_graphs, Np, F_in), np.float32)
    pool_ind = np.zeros((num_graphs, SUBLANE, Np), np.float32)
    inv_counts = np.zeros((num_graphs,), np.float32)
    for g in range(num_graphs):
        idx = np.nonzero(batch_np == g)[0]
        n = idx.size
        adj_blocks[g, :n, :n] = a_norm[np.ix_(idx, idx)]
        x_blocks[g, :n, :] = x_np[idx]
        pool_ind[g, 0, :n] = 1.0
        inv_counts[g] = 1.0 / max(n, 1)

    return (jnp.asarray(inv_counts), jnp.asarray(adj_blocks),
            jnp.asarray(x_blocks), jnp.asarray(pool_ind))


# ----------------------------------------------------------------------------
# Pure-JAX f32 reference (global dense form) + parameter init.
# ----------------------------------------------------------------------------
def build_gcn_adjacency(edge_index, num_nodes):
    src, dst = edge_index[0], edge_index[1]
    a = jnp.zeros((num_nodes, num_nodes), jnp.float32)
    a = a.at[dst, src].add(1.0)
    a = a + jnp.eye(num_nodes, dtype=jnp.float32)
    deg = a.sum(axis=1)
    dinv = jnp.where(deg > 0, 1.0 / jnp.sqrt(deg), 0.0)
    return dinv[:, None] * a * dinv[None, :]


def build_mean_pool(batch, num_graphs):
    onehot = (batch[None, :] == jnp.arange(num_graphs)[:, None]).astype(jnp.float32)
    counts = onehot.sum(axis=1, keepdims=True)
    return onehot / jnp.maximum(counts, 1.0)


def init_params(key, feature_size, hidden, emb_dim, num_classes):
    ks = jax.random.split(key, 10)

    def lin(k, fan_in, fan_out):
        scale = 1.0 / jnp.sqrt(fan_in)
        return jax.random.uniform(k, (fan_in, fan_out), jnp.float32, -scale, scale)

    w1 = lin(ks[0], feature_size, hidden); b1 = jnp.zeros((hidden,), jnp.float32)
    w2 = lin(ks[1], hidden, hidden);       b2 = jnp.zeros((hidden,), jnp.float32)
    w3 = lin(ks[2], hidden, hidden);       b3 = jnp.zeros((hidden,), jnp.float32)
    we = lin(ks[3], hidden, emb_dim)
    be = jax.random.uniform(ks[4], (emb_dim,), jnp.float32,
                            -1.0 / jnp.sqrt(hidden), 1.0 / jnp.sqrt(hidden))
    wc = lin(ks[5], emb_dim, num_classes)
    bc = jax.random.uniform(ks[6], (num_classes,), jnp.float32,
                            -1.0 / jnp.sqrt(emb_dim), 1.0 / jnp.sqrt(emb_dim))
    return (w1, b1, w2, b2, w3, b3, we, be, wc, bc)


def odor_gnn_reference(adj, pool, x, params):
    (w1, b1, w2, b2, w3, b3, we, be, wc, bc) = params

    def gcn(h, w, b):
        return adj @ (h @ w) + b.reshape(1, -1)

    h = jnp.maximum(gcn(x, w1, b1), 0.0)
    h = jnp.maximum(gcn(h, w2, b2), 0.0)
    h = jnp.maximum(gcn(h, w3, b3), 0.0)
    pooled = pool @ h
    emb = pooled @ we + be.reshape(1, -1)
    out = emb @ wc + bc.reshape(1, -1)
    return out, emb


if __name__ == "__main__":
    # Small, deterministic problem: 2 graphs x 8 nodes (ring graphs).
    feature_size, hidden, emb_dim, num_classes = 16, 32, 16, 8
    nodes_per_graph, num_graphs = 8, 2
    num_nodes = nodes_per_graph * num_graphs

    key = jax.random.PRNGKey(0)
    kx, kp = jax.random.split(key)

    x = jax.random.normal(kx, (num_nodes, feature_size), jnp.float32)

    # Undirected ring within each graph (both directions per edge).
    srcs, dsts = [], []
    for g in range(num_graphs):
        off = g * nodes_per_graph
        for i in range(nodes_per_graph):
            j = (i + 1) % nodes_per_graph
            srcs += [off + i, off + j]
            dsts += [off + j, off + i]
    edge_index = jnp.array([srcs, dsts], dtype=jnp.int32)    # (2, E)

    batch = jnp.repeat(jnp.arange(num_graphs, dtype=jnp.int32), nodes_per_graph)

    params = init_params(kp, feature_size, hidden, emb_dim, num_classes)

    inv_counts, adj_blocks, x_blocks, pool_ind = prepare_blocked_inputs(
        x, edge_index, batch, num_graphs)

    out, embedding = jax.jit(odor_gnn_forward)(
        inv_counts, adj_blocks, x_blocks, pool_ind, params)
    jax.block_until_ready((out, embedding))
    assert out.shape == (num_graphs, num_classes)
    assert embedding.shape == (num_graphs, emb_dim)

    # Sanity check against a pure-JAX f32 reference (bf16 MXU operands ->
    # loose tolerance; adjacency is bf16, mean-pool scale stays exact f32).
    adj = build_gcn_adjacency(edge_index, num_nodes)
    pool = build_mean_pool(batch, num_graphs)
    out_ref, emb_ref = odor_gnn_reference(adj, pool, x, params)
    assert float(jnp.max(jnp.abs(out - out_ref))) < 5e-2
    assert float(jnp.max(jnp.abs(embedding - emb_ref))) < 5e-2

    print("KERNEL_OK")
</pallas_src>

<mosaic_0001>
module attributes {stable_mosaic.version = 11 : i64} {
  func.func @odor_gnn_kernel(%arg0: i32, %arg1: memref<2xf32, #tpu.memory_space<smem>>, %arg2: memref<1x128x128xbf16, #tpu.memory_space<vmem>>, %arg3: memref<1x128x128xbf16, #tpu.memory_space<vmem>>, %arg4: memref<1x8x128xf32, #tpu.memory_space<vmem>>, %arg5: memref<5x128x128xbf16, #tpu.memory_space<vmem>>, %arg6: memref<8x128xf32, #tpu.memory_space<vmem>>, %arg7: memref<1x8x128xf32, #tpu.memory_space<vmem>>, %arg8: memref<1x8x128xf32, #tpu.memory_space<vmem>>) attributes {dimension_semantics = [#tpu.dimension_semantics<parallel>], iteration_bounds = array<i64: 2>, scalar_prefetch = 1 : i64, scratch_operands = 0 : i64, tpu.core_type = #tpu.core_type<tc>, window_params = [{transform_indices = @transform_0, window_bounds = array<i64: 1, 128, 128>}, {transform_indices = @transform_1, window_bounds = array<i64: 1, 128, 128>}, {transform_indices = @transform_2, window_bounds = array<i64: 1, 8, 128>}, {pipeline_mode = #tpu.pipeline_mode<synchronous>, transform_indices = @transform_3, window_bounds = array<i64: 5, 128, 128>}, {pipeline_mode = #tpu.pipeline_mode<synchronous>, transform_indices = @transform_4, window_bounds = array<i64: 8, 128>}, {transform_indices = @transform_5, window_bounds = array<i64: 1, 8, 128>}, {transform_indices = @transform_6, window_bounds = array<i64: 1, 8, 128>}]} {
    %c0 = arith.constant 0 : index
    %c0_0 = arith.constant 0 : index
    %c0_1 = arith.constant 0 : index
    %0 = vector.load %arg3[%c0, %c0_0, %c0_1] : memref<1x128x128xbf16, #tpu.memory_space<vmem>>, vector<1x128x128xbf16>
    %1 = vector.shape_cast %0 : vector<1x128x128xbf16> to vector<128x128xbf16>
    %c0_2 = arith.constant 0 : index
    %c0_3 = arith.constant 0 : index
    %c0_4 = arith.constant 0 : index
    %2 = vector.load %arg5[%c0_2, %c0_3, %c0_4] : memref<5x128x128xbf16, #tpu.memory_space<vmem>>, vector<1x128x128xbf16>
    %3 = vector.shape_cast %2 : vector<1x128x128xbf16> to vector<128x128xbf16>
    %cst = arith.constant dense<0.000000e+00> : vector<128x128xf32>
    %4 = tpu.matmul %1, %3, %cst {dimension_numbers = #tpu.dot_dimension_numbers<[1], [0], [0], [1], [0, 0, 1, 1], [], []>} : vector<128x128xbf16>, vector<128x128xbf16>, vector<128x128xf32> -> vector<128x128xf32>
    %c0_5 = arith.constant 0 : index
    %c0_6 = arith.constant 0 : index
    %c0_7 = arith.constant 0 : index
    %5 = vector.load %arg2[%c0_5, %c0_6, %c0_7] : memref<1x128x128xbf16, #tpu.memory_space<vmem>>, vector<1x128x128xbf16>
    %6 = vector.shape_cast %5 : vector<1x128x128xbf16> to vector<128x128xbf16>
    %7 = arith.truncf %4 : vector<128x128xf32> to vector<128x128xbf16>
    %cst_8 = arith.constant dense<0.000000e+00> : vector<128x128xf32>
    %8 = tpu.matmul %6, %7, %cst_8 {dimension_numbers = #tpu.dot_dimension_numbers<[1], [0], [0], [1], [0, 0, 1, 1], [], []>} : vector<128x128xbf16>, vector<128x128xbf16>, vector<128x128xf32> -> vector<128x128xf32>
    %c0_9 = arith.constant 0 : index
    %c0_10 = arith.constant 0 : index
    %9 = vector.load %arg6[%c0_9, %c0_10] : memref<8x128xf32, #tpu.memory_space<vmem>>, vector<1x128xf32>
    %10 = vector.broadcast %9 : vector<1x128xf32> to vector<128x128xf32>
    %11 = arith.addf %8, %10 : vector<128x128xf32>
    %cst_11 = arith.constant 0.000000e+00 : f32
    %12 = vector.broadcast %cst_11 : f32 to vector<128x128xf32>
    %13 = arith.maximumf %11, %12 : vector<128x128xf32>
    %14 = arith.truncf %13 : vector<128x128xf32> to vector<128x128xbf16>
    %c1 = arith.constant 1 : index
    %c0_12 = arith.constant 0 : index
    %c0_13 = arith.constant 0 : index
    %15 = vector.load %arg5[%c1, %c0_12, %c0_13] : memref<5x128x128xbf16, #tpu.memory_space<vmem>>, vector<1x128x128xbf16>
    %16 = vector.shape_cast %15 : vector<1x128x128xbf16> to vector<128x128xbf16>
    %cst_14 = arith.constant dense<0.000000e+00> : vector<128x128xf32>
    %17 = tpu.matmul %14, %16, %cst_14 {dimension_numbers = #tpu.dot_dimension_numbers<[1], [0], [0], [1], [0, 0, 1, 1], [], []>} : vector<128x128xbf16>, vector<128x128xbf16>, vector<128x128xf32> -> vector<128x128xf32>
    %c0_15 = arith.constant 0 : index
    %c0_16 = arith.constant 0 : index
    %c0_17 = arith.constant 0 : index
    %18 = vector.load %arg2[%c0_15, %c0_16, %c0_17] : memref<1x128x128xbf16, #tpu.memory_space<vmem>>, vector<1x128x128xbf16>
    %19 = vector.shape_cast %18 : vector<1x128x128xbf16> to vector<128x128xbf16>
    %20 = arith.truncf %17 : vector<128x128xf32> to vector<128x128xbf16>
    %cst_18 = arith.constant dense<0.000000e+00> : vector<128x128xf32>
    %21 = tpu.matmul %19, %20, %cst_18 {dimension_numbers = #tpu.dot_dimension_numbers<[1], [0], [0], [1], [0, 0, 1, 1], [], []>} : vector<128x128xbf16>, vector<128x128xbf16>, vector<128x128xf32> -> vector<128x128xf32>
    %c1_19 = arith.constant 1 : index
    %c0_20 = arith.constant 0 : index
    %22 = vector.load %arg6[%c1_19, %c0_20] : memref<8x128xf32, #tpu.memory_space<vmem>>, vector<1x128xf32>
    %23 = vector.broadcast %22 : vector<1x128xf32> to vector<128x128xf32>
    %24 = arith.addf %21, %23 : vector<128x128xf32>
    %cst_21 = arith.constant 0.000000e+00 : f32
    %25 = vector.broadcast %cst_21 : f32 to vector<128x128xf32>
    %26 = arith.maximumf %24, %25 : vector<128x128xf32>
    %27 = arith.truncf %26 : vector<128x128xf32> to vector<128x128xbf16>
    %c2 = arith.constant 2 : index
    %c0_22 = arith.constant 0 : index
    %c0_23 = arith.constant 0 : index
    %28 = vector.load %arg5[%c2, %c0_22, %c0_23] : memref<5x128x128xbf16, #tpu.memory_space<vmem>>, vector<1x128x128xbf16>
    %29 = vector.shape_cast %28 : vector<1x128x128xbf16> to vector<128x128xbf16>
    %cst_24 = arith.constant dense<0.000000e+00> : vector<128x128xf32>
    %30 = tpu.matmul %27, %29, %cst_24 {dimension_numbers = #tpu.dot_dimension_numbers<[1], [0], [0], [1], [0, 0, 1, 1], [], []>} : vector<128x128xbf16>, vector<128x128xbf16>, vector<128x128xf32> -> vector<128x128xf32>
    %c0_25 = arith.constant 0 : index
    %c0_26 = arith.constant 0 : index
    %c0_27 = arith.constant 0 : index
    %31 = vector.load %arg2[%c0_25, %c0_26, %c0_27] : memref<1x128x128xbf16, #tpu.memory_space<vmem>>, vector<1x128x128xbf16>
    %32 = vector.shape_cast %31 : vector<1x128x128xbf16> to vector<128x128xbf16>
    %33 = arith.truncf %30 : vector<128x128xf32> to vector<128x128xbf16>
    %cst_28 = arith.constant dense<0.000000e+00> : vector<128x128xf32>
    %34 = tpu.matmul %32, %33, %cst_28 {dimension_numbers = #tpu.dot_dimension_numbers<[1], [0], [0], [1], [0, 0, 1, 1], [], []>} : vector<128x128xbf16>, vector<128x128xbf16>, vector<128x128xf32> -> vector<128x128xf32>
    %c2_29 = arith.constant 2 : index
    %c0_30 = arith.constant 0 : index
    %35 = vector.load %arg6[%c2_29, %c0_30] : memref<8x128xf32, #tpu.memory_space<vmem>>, vector<1x128xf32>
    %36 = vector.broadcast %35 : vector<1x128xf32> to vector<128x128xf32>
    %37 = arith.addf %34, %36 : vector<128x128xf32>
    %cst_31 = arith.constant 0.000000e+00 : f32
    %38 = vector.broadcast %cst_31 : f32 to vector<128x128xf32>
    %39 = arith.maximumf %37, %38 : vector<128x128xf32>
    %40 = arith.truncf %39 : vector<128x128xf32> to vector<128x128xbf16>
    %c0_32 = arith.constant 0 : index
    %c0_33 = arith.constant 0 : index
    %c0_34 = arith.constant 0 : index
    %41 = vector.load %arg4[%c0_32, %c0_33, %c0_34] : memref<1x8x128xf32, #tpu.memory_space<vmem>>, vector<1x8x128xf32>
    %42 = vector.shape_cast %41 : vector<1x8x128xf32> to vector<8x128xf32>
    %43 = arith.truncf %42 : vector<8x128xf32> to vector<8x128xbf16>
    %cst_35 = arith.constant dense<0.000000e+00> : vector<8x128xf32>
    %44 = tpu.matmul %43, %40, %cst_35 {dimension_numbers = #tpu.dot_dimension_numbers<[1], [0], [0], [1], [0, 0, 1, 1], [], []>} : vector<8x128xbf16>, vector<128x128xbf16>, vector<8x128xf32> -> vector<8x128xf32>
    %45 = arith.index_cast %arg0 : i32 to index
    %46 = memref.load %arg1[%45] : memref<2xf32, #tpu.memory_space<smem>>
    %47 = vector.broadcast %46 : f32 to vector<8x128xf32>
    %48 = arith.mulf %44, %47 : vector<8x128xf32>
    %49 = arith.truncf %48 : vector<8x128xf32> to vector<8x128xbf16>
    %c3 = arith.constant 3 : index
    %c0_36 = arith.constant 0 : index
    %c0_37 = arith.constant 0 : index
    %50 = vector.load %arg5[%c3, %c0_36, %c0_37] : memref<5x128x128xbf16, #tpu.memory_space<vmem>>, vector<1x128x128xbf16>
    %51 = vector.shape_cast %50 : vector<1x128x128xbf16> to vector<128x128xbf16>
    %cst_38 = arith.constant dense<0.000000e+00> : vector<8x128xf32>
    %52 = tpu.matmul %49, %51, %cst_38 {dimension_numbers = #tpu.dot_dimension_numbers<[1], [0], [0], [1], [0, 0, 1, 1], [], []>} : vector<8x128xbf16>, vector<128x128xbf16>, vector<8x128xf32> -> vector<8x128xf32>
    %c3_39 = arith.constant 3 : index
    %c0_40 = arith.constant 0 : index
    %53 = vector.load %arg6[%c3_39, %c0_40] : memref<8x128xf32, #tpu.memory_space<vmem>>, vector<1x128xf32>
    %54 = vector.broadcast %53 : vector<1x128xf32> to vector<8x128xf32>
    %55 = arith.addf %52, %54 : vector<8x128xf32>
    %56 = arith.truncf %55 : vector<8x128xf32> to vector<8x128xbf16>
    %c4 = arith.constant 4 : index
    %c0_41 = arith.constant 0 : index
    %c0_42 = arith.constant 0 : index
    %57 = vector.load %arg5[%c4, %c0_41, %c0_42] : memref<5x128x128xbf16, #tpu.memory_space<vmem>>, vector<1x128x128xbf16>
    %58 = vector.shape_cast %57 : vector<1x128x128xbf16> to vector<128x128xbf16>
    %cst_43 = arith.constant dense<0.000000e+00> : vector<8x128xf32>
    %59 = tpu.matmul %56, %58, %cst_43 {dimension_numbers = #tpu.dot_dimension_numbers<[1], [0], [0], [1], [0, 0, 1, 1], [], []>} : vector<8x128xbf16>, vector<128x128xbf16>, vector<8x128xf32> -> vector<8x128xf32>
    %c4_44 = arith.constant 4 : index
    %c0_45 = arith.constant 0 : index
    %60 = vector.load %arg6[%c4_44, %c0_45] : memref<8x128xf32, #tpu.memory_space<vmem>>, vector<1x128xf32>
    %61 = vector.broadcast %60 : vector<1x128xf32> to vector<8x128xf32>
    %62 = arith.addf %59, %61 : vector<8x128xf32>
    %c0_46 = arith.constant 0 : index
    %c0_47 = arith.constant 0 : index
    %c0_48 = arith.constant 0 : index
    %63 = vector.load %arg8[%c0_46, %c0_47, %c0_48] : memref<1x8x128xf32, #tpu.memory_space<vmem>>, vector<1x8x128xf32>
    %64 = vector.shape_cast %63 : vector<1x8x128xf32> to vector<8x128xf32>
    %65 = vector.shape_cast %55 : vector<8x128xf32> to vector<1x8x128xf32>
    tpu.vector_store %arg8[%c0_46, %c0_47, %c0_48], %65 {strides = array<i32>} : memref<1x8x128xf32, #tpu.memory_space<vmem>>, vector<1x8x128xf32>,
    %c0_49 = arith.constant 0 : index
    %c0_50 = arith.constant 0 : index
    %c0_51 = arith.constant 0 : index
    %66 = vector.load %arg7[%c0_49, %c0_50, %c0_51] : memref<1x8x128xf32, #tpu.memory_space<vmem>>, vector<1x8x128xf32>
    %67 = vector.shape_cast %66 : vector<1x8x128xf32> to vector<8x128xf32>
    %68 = vector.shape_cast %62 : vector<8x128xf32> to vector<1x8x128xf32>
    tpu.vector_store %arg7[%c0_49, %c0_50, %c0_51], %68 {strides = array<i32>} : memref<1x8x128xf32, #tpu.memory_space<vmem>>, vector<1x8x128xf32>,
    return
  }
  func.func @transform_0(%arg0: i32, %arg1: memref<2xf32, #tpu.memory_space<smem>>) -> (i32, i32, i32) {
    %c0_i32 = arith.constant 0 : i32
    %c0_i32_0 = arith.constant 0 : i32
    %c0_i32_1 = arith.constant 0 : i32
    return %arg0, %c0_i32, %c0_i32_0 : i32, i32, i32
  }
  func.func @transform_1(%arg0: i32, %arg1: memref<2xf32, #tpu.memory_space<smem>>) -> (i32, i32, i32) {
    %c0_i32 = arith.constant 0 : i32
    %c0_i32_0 = arith.constant 0 : i32
    %c0_i32_1 = arith.constant 0 : i32
    return %arg0, %c0_i32, %c0_i32_0 : i32, i32, i32
  }
  func.func @transform_2(%arg0: i32, %arg1: memref<2xf32, #tpu.memory_space<smem>>) -> (i32, i32, i32) {
    %c0_i32 = arith.constant 0 : i32
    %c0_i32_0 = arith.constant 0 : i32
    %c0_i32_1 = arith.constant 0 : i32
    return %arg0, %c0_i32, %c0_i32_0 : i32, i32, i32
  }
  func.func @transform_3(%arg0: i32, %arg1: memref<2xf32, #tpu.memory_space<smem>>) -> (i32, i32, i32) {
    %c0_i32 = arith.constant 0 : i32
    %c0_i32_0 = arith.constant 0 : i32
    %c0_i32_1 = arith.constant 0 : i32
    %c0_i32_2 = arith.constant 0 : i32
    return %c0_i32, %c0_i32_0, %c0_i32_1 : i32, i32, i32
  }
  func.func @transform_4(%arg0: i32, %arg1: memref<2xf32, #tpu.memory_space<smem>>) -> (i32, i32) {
    %c0_i32 = arith.constant 0 : i32
    %c0_i32_0 = arith.constant 0 : i32
    %c0_i32_1 = arith.constant 0 : i32
    return %c0_i32, %c0_i32_0 : i32, i32
  }
  func.func @transform_5(%arg0: i32, %arg1: memref<2xf32, #tpu.memory_space<smem>>) -> (i32, i32, i32) {
    %c0_i32 = arith.constant 0 : i32
    %c0_i32_0 = arith.constant 0 : i32
    %c0_i32_1 = arith.constant 0 : i32
    return %arg0, %c0_i32, %c0_i32_0 : i32, i32, i32
  }
  func.func @transform_6(%arg0: i32, %arg1: memref<2xf32, #tpu.memory_space<smem>>) -> (i32, i32, i32) {
    %c0_i32 = arith.constant 0 : i32
    %c0_i32_0 = arith.constant 0 : i32
    %c0_i32_1 = arith.constant 0 : i32
    return %arg0, %c0_i32, %c0_i32_0 : i32, i32, i32
  }
}

</mosaic_0001>

<llo_original>
// kernel: odor_gnn_forward.1
$region0: #{odor_gnn_forward.1}
  #allocation0 [shape = 'u32[]', space=smem, size = 0x4, offset = 0x4, fixed_abs, tag = 'smem constant byte address 0x4 - core index']
  #allocation1 [shape = 'u32[144,128]{1,0:T(1,128)}', space=vmem, size = 0x12000, scoped, tag = 'internal scratch']
  #allocation2 [shape = 's32[1]{0}', space=sflag, size = 0x4, scoped, tag = 'scoped memory for odor_gnn_forward.1']
  #allocation3 [shape = 'u8[512]{0}', space=smem, size = 0x200, scoped, tag = 'prefetched SMEM operand 0']
  %s0 = inlined_call_operand.vmem [shape: f32[2], index: 0, kind: input, shape index: {}]
  %s1 = inlined_call_operand.vmem [shape: bf16[2,128,128], index: 1, kind: input, shape index: {}]
  %s2 = inlined_call_operand.vmem [shape: bf16[2,128,128], index: 2, kind: input, shape index: {}]
  %s3 = inlined_call_operand.vmem [shape: f32[2,8,128], index: 3, kind: input, shape index: {}]
  %s4 = inlined_call_operand.vmem [shape: bf16[5,128,128], index: 4, kind: input, shape index: {}]
  %s5 = inlined_call_operand.vmem [shape: f32[8,128], index: 5, kind: input, shape index: {}]
  %s6 = inlined_call_operand.vmem [shape: f32[2,8,128], index: 6, kind: output, shape index: {0}]
  %s7 = inlined_call_operand.vmem [shape: f32[2,8,128], index: 7, kind: output, shape index: {1}]
  %8 = xla_tuple %s6, %s7
  %s9 = sld [smem:[#allocation0]]
  $region61: #{odor_gnn_forward.1} parent=0
    _
  %s11 = ssub.s32 1, %s9
  %s12 = scalar_select 0, %s11, %s9
  %s13 = sshll.u32 %s0, 4
  %s14 = int_to_ptr.vmem [resolvable:$true] %s13
  %16 = dma.vmem_to_smem %s14, 16, [#allocation3], [#allocation2]
  %17 = dma.done [#allocation2], 16
  %18 = sfence
  loop: start=0, step=1, limit=4
  $region2: #{odor_gnn_forward.1} parent=0 // loop_pre_header
    _
  $region3: #{odor_gnn_forward.1} parent=0 // loop_header
    %s20 = sphi 0, %s24
    %p21 = scmp.ge.s32.totalorder %s20, 4
    %s30 = sphi 0, %s32
    %s33 = sphi 0, %s30
    %s34 = sphi 0, %s33
    %s50 = sphi 0, %s34
    %s56 = sphi 0, %s58
    %s59 = sphi 0, %s56
    %s60 = sphi 0, %s59
    %s76 = sphi 0, %s60
    %s82 = sphi 0, %s84
    %s85 = sphi 0, %s82
    %s86 = sphi 0, %s85
    %s102 = sphi 0, %s86
    %s106 = sphi 0, %s106
    %s108 = sphi 0, %s106
    %s109 = sphi 0, %s108
    %s123 = sphi 0, %s109
    %s127 = sphi 0, %s127
    %s129 = sphi 0, %s127
    %s130 = sphi 0, %s129
    %s144 = sphi 0, %s130
    %s150 = sphi 0, %s152
    %s153 = sphi 0, %s150
    %s154 = sphi 0, %s153
    %s170 = sphi 0, %s154
    %s176 = sphi 0, %s178
    %s179 = sphi 0, %s176
    %s180 = sphi 0, %s179
    %s196 = sphi 0, %s180
  $region4: #{odor_gnn_forward.1} parent=0 // loop_header_branch
    %23 = sbr.rel (%p21) target = $region8
  $region5: #{odor_gnn_forward.1} parent=0 // loop_body
    %s25 = ssub.s32 %s20, 1
    %s26 = ssub.s32 %s20, 2
    %s27 = sadd.s32 %s20, 1
    %s28 = ssub.s32 %s20, %s27
    %p29 = scmp.eq.s32.totalorder %s28, 0
    %s31 = sadd.s32 %s30, 1
    %s32 = scalar_select %p29, %s30, %s31
    %p35 = pneg %p29
    %p36 = scmp.eq.s32.totalorder %s20, 1
    %p37 = por %p35, %p36
    %p38 = scmp.ne.s32.totalorder %s30, %s33
    %p39 = scmp.eq.s32.totalorder %s20, 0
    %p40 = por %p38, %p39
    %p41 = scmp.ne.s32.totalorder %s30, %s33
    %p42 = scmp.eq.s32.totalorder %s25, 1
    %p43 = por %p41, %p42
    %p44 = scmp.ne.s32.totalorder %s33, %s34
    %p45 = scmp.eq.s32.totalorder %s25, 0
    %p46 = por %p44, %p45
    %p47 = scmp.ne.s32.totalorder %s33, %s34
    %p48 = scmp.eq.s32.totalorder %s26, 1
    %p49 = por %p47, %p48
    %p51 = scmp.ne.s32.totalorder %s34, %s50
    %p52 = scmp.eq.s32.totalorder %s26, 0
    %p53 = por %p51, %p52
    %s54 = ssub.s32 %s20, %s27
    %p55 = scmp.eq.s32.totalorder %s54, 0
    %s57 = sadd.s32 %s56, 1
    %s58 = scalar_select %p55, %s56, %s57
    %p61 = pneg %p55
    %p62 = scmp.eq.s32.totalorder %s20, 1
    %p63 = por %p61, %p62
    %p64 = scmp.ne.s32.totalorder %s56, %s59
    %p65 = scmp.eq.s32.totalorder %s20, 0
    %p66 = por %p64, %p65
    %p67 = scmp.ne.s32.totalorder %s56, %s59
    %p68 = scmp.eq.s32.totalorder %s25, 1
    %p69 = por %p67, %p68
    %p70 = scmp.ne.s32.totalorder %s59, %s60
    %p71 = scmp.eq.s32.totalorder %s25, 0
    %p72 = por %p70, %p71
    %p73 = scmp.ne.s32.totalorder %s59, %s60
    %p74 = scmp.eq.s32.totalorder %s26, 1
    %p75 = por %p73, %p74
    %p77 = scmp.ne.s32.totalorder %s60, %s76
    %p78 = scmp.eq.s32.totalorder %s26, 0
    %p79 = por %p77, %p78
    %s80 = ssub.s32 %s20, %s27
    %p81 = scmp.eq.s32.totalorder %s80, 0
    %s83 = sadd.s32 %s82, 1
    %s84 = scalar_select %p81, %s82, %s83
    %p87 = pneg %p81
    %p88 = scmp.eq.s32.totalorder %s20, 1
    %p89 = por %p87, %p88
    %p90 = scmp.ne.s32.totalorder %s82, %s85
    %p91 = scmp.eq.s32.totalorder %s20, 0
    %p92 = por %p90, %p91
    %p93 = scmp.ne.s32.totalorder %s82, %s85
    %p94 = scmp.eq.s32.totalorder %s25, 1
    %p95 = por %p93, %p94
    %p96 = scmp.ne.s32.totalorder %s85, %s86
    %p97 = scmp.eq.s32.totalorder %s25, 0
    %p98 = por %p96, %p97
    %p99 = scmp.ne.s32.totalorder %s85, %s86
    %p100 = scmp.eq.s32.totalorder %s26, 1
    %p101 = por %p99, %p100
    %p103 = scmp.ne.s32.totalorder %s86, %s102
    %p104 = scmp.eq.s32.totalorder %s26, 0
    %p105 = por %p103, %p104
    %s107 = sadd.s32 %s106, 1
    %p110 = scmp.eq.s32.totalorder %s20, 1
    %p111 = scmp.ne.s32.totalorder %s106, %s108
    %p112 = scmp.eq.s32.totalorder %s20, 0
    %p113 = por %p111, %p112
    %p114 = scmp.ne.s32.totalorder %s106, %s108
    %p115 = scmp.eq.s32.totalorder %s25, 1
    %p116 = por %p114, %p115
    %p117 = scmp.ne.s32.totalorder %s108, %s109
    %p118 = scmp.eq.s32.totalorder %s25, 0
    %p119 = por %p117, %p118
    %p120 = scmp.ne.s32.totalorder %s108, %s109
    %p121 = scmp.eq.s32.totalorder %s26, 1
    %p122 = por %p120, %p121
    %p124 = scmp.ne.s32.totalorder %s109, %s123
    %p125 = scmp.eq.s32.totalorder %s26, 0
    %p126 = por %p124, %p125
    %s128 = sadd.s32 %s127, 1
    %p131 = scmp.eq.s32.totalorder %s20, 1
    %p132 = scmp.ne.s32.totalorder %s127, %s129
    %p133 = scmp.eq.s32.totalorder %s20, 0
    %p134 = por %p132, %p133
    %p135 = scmp.ne.s32.totalorder %s127, %s129
    %p136 = scmp.eq.s32.totalorder %s25, 1
    %p137 = por %p135, %p136
    %p138 = scmp.ne.s32.totalorder %s129, %s130
    %p139 = scmp.eq.s32.totalorder %s25, 0
    %p140 = por %p138, %p139
    %p141 = scmp.ne.s32.totalorder %s129, %s130
    %p142 = scmp.eq.s32.totalorder %s26, 1
    %p143 = por %p141, %p142
    %p145 = scmp.ne.s32.totalorder %s130, %s144
    %p146 = scmp.eq.s32.totalorder %s26, 0
    %p147 = por %p145, %p146
    %s148 = ssub.s32 %s20, %s27
    %p149 = scmp.eq.s32.totalorder %s148, 0
    %s151 = sadd.s32 %s150, 1
    %s152 = scalar_select %p149, %s150, %s151
    %p155 = pneg %p149
    %p156 = scmp.eq.s32.totalorder %s20, 1
    %p157 = por %p155, %p156
    %p158 = scmp.ne.s32.totalorder %s150, %s153
    %p159 = scmp.eq.s32.totalorder %s20, 0
    %p160 = por %p158, %p159
    %p161 = scmp.ne.s32.totalorder %s150, %s153
    %p162 = scmp.eq.s32.totalorder %s25, 1
    %p163 = por %p161, %p162
    %p164 = scmp.ne.s32.totalorder %s153, %s154
    %p165 = scmp.eq.s32.totalorder %s25, 0
    %p166 = por %p164, %p165
    %p167 = scmp.ne.s32.totalorder %s153, %s154
    %p168 = scmp.eq.s32.totalorder %s26, 1
    %p169 = por %p167, %p168
    %p171 = scmp.ne.s32.totalorder %s154, %s170
    %p172 = scmp.eq.s32.totalorder %s26, 0
    %p173 = por %p171, %p172
    %s174 = ssub.s32 %s20, %s27
    %p175 = scmp.eq.s32.totalorder %s174, 0
    %s177 = sadd.s32 %s176, 1
    %s178 = scalar_select %p175, %s176, %s177
    %p181 = pneg %p175
    %p182 = scmp.eq.s32.totalorder %s20, 1
    %p183 = por %p181, %p182
    %p184 = scmp.ne.s32.totalorder %s176, %s179
    %p185 = scmp.eq.s32.totalorder %s20, 0
    %p186 = por %p184, %p185
    %p187 = scmp.ne.s32.totalorder %s176, %s179
    %p188 = scmp.eq.s32.totalorder %s25, 1
    %p189 = por %p187, %p188
    %p190 = scmp.ne.s32.totalorder %s179, %s180
    %p191 = scmp.eq.s32.totalorder %s25, 0
    %p192 = por %p190, %p191
    %p193 = scmp.ne.s32.totalorder %s179, %s180
    %p194 = scmp.eq.s32.totalorder %s26, 1
    %p195 = por %p193, %p194
    %p197 = scmp.ne.s32.totalorder %s180, %s196
    %p198 = scmp.eq.s32.totalorder %s26, 0
    %p199 = por %p197, %p198
    %p200 = scmp.le.s32.totalorder 1, %s20
    %p201 = scmp.lt.s32.totalorder %s20, 3
    %p202 = pnand %p200, %p201
    %p203 = pneg %p202
    // Predicated region
    $region9: #{odor_gnn_forward.1} parent=5 // pred_check
      _
    $region10: #{odor_gnn_forward.1} parent=5 // pred_check_branch
      %205 = sbr.rel (%p202) target = $region12
    $region11: #{odor_gnn_forward.1} parent=5 // pred_region
      %s206 = ssub.s32 %s20, 1
      // Predicated region
      $region13: #{odor_gnn_forward.1} parent=11 // pred_check
        %p207 = pneg %p119
      $region14: #{odor_gnn_forward.1} parent=11 // pred_check_branch
        %209 = sbr.rel (%p207) target = $region16
      $region15: #{odor_gnn_forward.1} parent=11 // pred_region
        _
      $region16: #{odor_gnn_forward.1} parent=11 // pred_fallthru
        _
      // Predicated region
      $region17: #{odor_gnn_forward.1} parent=11 // pred_check
        %p210 = pneg %p140
      $region18: #{odor_gnn_forward.1} parent=11 // pred_check_branch
        %212 = sbr.rel (%p210) target = $region20
      $region19: #{odor_gnn_forward.1} parent=11 // pred_region
        _
      $region20: #{odor_gnn_forward.1} parent=11 // pred_fallthru
        _
    $region12: #{odor_gnn_forward.1} parent=5 // pred_fallthru
      _
    %p213 = scmp.lt.s32.totalorder %s20, 2
    // Predicated region
    $region21: #{odor_gnn_forward.1} parent=5 // pred_check
      %p214 = pneg %p213
    $region22: #{odor_gnn_forward.1} parent=5 // pred_check_branch
      %216 = sbr.rel (%p214) target = $region24
    $region23: #{odor_gnn_forward.1} parent=5 // pred_region
      // Predicated region
      $region25: #{odor_gnn_forward.1} parent=23 // pred_check
        %p217 = pneg %p40
      $region26: #{odor_gnn_forward.1} parent=23 // pred_check_branch
        %219 = sbr.rel (%p217) target = $region28
      $region27: #{odor_gnn_forward.1} parent=23 // pred_region
        %p220 = scmp.lt.s32.totalorder %s20, 1
        %s221 = scalar_select %p220, %s20, 1
        %s222 = smul.addr %s221, 16
        %s223 = smul.addr %s222, 4
        %s224 = scalar_lea.vmem %s1, %s223
      $region28: #{odor_gnn_forward.1} parent=23 // pred_fallthru
        _
      // Predicated region
      $region29: #{odor_gnn_forward.1} parent=23 // pred_check
        %p225 = pneg %p66
      $region30: #{odor_gnn_forward.1} parent=23 // pred_check_branch
        %227 = sbr.rel (%p225) target = $region32
      $region31: #{odor_gnn_forward.1} parent=23 // pred_region
        %p228 = scmp.lt.s32.totalorder %s20, 1
        %s229 = scalar_select %p228, %s20, 1
        %s230 = smul.addr %s229, 16
        %s231 = smul.addr %s230, 4
        %s232 = scalar_lea.vmem %s2, %s231
      $region32: #{odor_gnn_forward.1} parent=23 // pred_fallthru
        _
      // Predicated region
      $region33: #{odor_gnn_forward.1} parent=23 // pred_check
        %p233 = pneg %p92
      $region34: #{odor_gnn_forward.1} parent=23 // pred_check_branch
        %235 = sbr.rel (%p233) target = $region36
      $region35: #{odor_gnn_forward.1} parent=23 // pred_region
        %p236 = scmp.lt.s32.totalorder %s20, 1
        %s237 = scalar_select %p236, %s20, 1
        %s238 = smul.addr %s237, 8
        %s239 = scalar_lea.vmem %s3, %s238
      $region36: #{odor_gnn_forward.1} parent=23 // pred_fallthru
        _
    $region24: #{odor_gnn_forward.1} parent=5 // pred_fallthru
      _
    %p240 = scmp.le.s32.totalorder 1, %s20
    %p241 = scmp.lt.s32.totalorder %s20, 3
    %p242 = pnand %p240, %p241
    %p243 = pneg %p242
    // Predicated region
    $region37: #{odor_gnn_forward.1} parent=5 // pred_check
      _
    $region38: #{odor_gnn_forward.1} parent=5 // pred_check_branch
      %245 = sbr.rel (%p242) target = $region40
    $region39: #{odor_gnn_forward.1} parent=5 // pred_region
      %s246 = ssub.s32 %s20, 1
      %p247 = scmp.lt.s32.totalorder %s25, 1
      %s248 = scalar_select %p247, %s25, 1
      %s249 = smul.addr %s248, 16
      %s250 = smul.addr %s249, 4
      %s251 = scalar_lea.vmem %s1, %s250
      %p252 = pneg %p46
      %p253 = pneg %p43
      %p254 = scmp.lt.s32.totalorder %s25, 1
      %s255 = scalar_select %p254, %s25, 1
      %s256 = smul.addr %s255, 16
      %s257 = smul.addr %s256, 4
      %s258 = scalar_lea.vmem %s2, %s257
      %p259 = pneg %p72
      %p260 = pneg %p69
      %p261 = scmp.lt.s32.totalorder %s25, 1
      %s262 = scalar_select %p261, %s25, 1
      %s263 = smul.addr %s262, 8
      %s264 = scalar_lea.vmem %s3, %s263
      %p265 = pneg %p98
      %p266 = pneg %p95
      %p267 = pneg %p119
      %p268 = pneg %p116
      %p269 = pneg %p140
      %p270 = pneg %p137
      %p271 = pneg %p166
      %p272 = pneg %p163
      %p273 = scmp.lt.s32.totalorder %s25, 1
      %s274 = scalar_select %p273, %s25, 1
      %s275 = smul.addr %s274, 8
      %s276 = scalar_lea.vmem %s6, %s275
      %p277 = pneg %p192
      %p278 = pneg %p189
      %p279 = scmp.lt.s32.totalorder %s25, 1
      %s280 = scalar_select %p279, %s25, 1
      %s281 = smul.addr %s280, 8
      %s282 = scalar_lea.vmem %s7, %s281
      %p283 = scmp.lt.s32.totalorder %s25, 1
      %s284 = scalar_select %p283, %s25, 1
      %s285 = smul.addr %s284, 16
      %s286 = smul.addr %s285, 4
      %s287 = scalar_lea.vmem %s1, %s286
      %p288 = scmp.lt.s32.totalorder %s25, 1
      %s289 = scalar_select %p288, %s25, 1
      %s290 = smul.addr %s289, 16
      %s291 = smul.addr %s290, 4
      %s292 = scalar_lea.vmem %s2, %s291
      %p293 = scmp.lt.s32.totalorder %s25, 1
      %s294 = scalar_select %p293, %s25, 1
      %s295 = smul.addr %s294, 8
      %s296 = scalar_lea.vmem %s3, %s295
      %p297 = scmp.lt.s32.totalorder %s25, 1
      %s298 = scalar_select %p297, %s25, 1
      %s299 = smul.addr %s298, 8
      %s300 = scalar_lea.vmem %s6, %s299
      %p301 = scmp.lt.s32.totalorder %s25, 1
      %s302 = scalar_select %p301, %s25, 1
      %s303 = smul.addr %s302, 8
      %s304 = scalar_lea.vmem %s7, %s303
      %v306 = vld [vmem:[%s292] sm:$0xf]
      %v307 = vld [vmem:[%s292 + $0x4] sm:$0xf]
      %v308 = vld [vmem:[%s292 + $0x8] sm:$0xf]
      %v309 = vld [vmem:[%s292 + $0xc] sm:$0xf]
      %v310 = vld [vmem:[%s292 + $0x10] sm:$0xf]
      %v311 = vld [vmem:[%s292 + $0x14] sm:$0xf]
      %v312 = vld [vmem:[%s292 + $0x18] sm:$0xf]
      %v313 = vld [vmem:[%s292 + $0x1c] sm:$0xf]
      %v314 = vld [vmem:[%s292 + $0x20] sm:$0xf]
      %v315 = vld [vmem:[%s292 + $0x24] sm:$0xf]
      %v316 = vld [vmem:[%s292 + $0x28] sm:$0xf]
      %v317 = vld [vmem:[%s292 + $0x2c] sm:$0xf]
      %v318 = vld [vmem:[%s292 + $0x30] sm:$0xf]
      %v319 = vld [vmem:[%s292 + $0x34] sm:$0xf]
      %v320 = vld [vmem:[%s292 + $0x38] sm:$0xf]
      %v321 = vld [vmem:[%s292 + $0x3c] sm:$0xf]
      %v322 = vld [vmem:[%s4] sm:$0xf]
      %v323 = vld [vmem:[%s4 + $0x4] sm:$0xf]
      %v324 = vld [vmem:[%s4 + $0x8] sm:$0xf]
      %v325 = vld [vmem:[%s4 + $0xc] sm:$0xf]
      %v326 = vld [vmem:[%s4 + $0x10] sm:$0xf]
      %v327 = vld [vmem:[%s4 + $0x14] sm:$0xf]
      %v328 = vld [vmem:[%s4 + $0x18] sm:$0xf]
      %v329 = vld [vmem:[%s4 + $0x1c] sm:$0xf]
      %v330 = vld [vmem:[%s4 + $0x20] sm:$0xf]
      %v331 = vld [vmem:[%s4 + $0x24] sm:$0xf]
      %v332 = vld [vmem:[%s4 + $0x28] sm:$0xf]
      %v333 = vld [vmem:[%s4 + $0x2c] sm:$0xf]
      %v334 = vld [vmem:[%s4 + $0x30] sm:$0xf]
      %v335 = vld [vmem:[%s4 + $0x34] sm:$0xf]
      %v336 = vld [vmem:[%s4 + $0x38] sm:$0xf]
      %v337 = vld [vmem:[%s4 + $0x3c] sm:$0xf]
      %v354 = vunpack.c.l.b16 %v306
      %v355 = vunpack.c.l.b16 %v307
      %v356 = vunpack.c.l.b16 %v308
      %v357 = vunpack.c.l.b16 %v309
      %v358 = vunpack.c.l.b16 %v310
      %v359 = vunpack.c.l.b16 %v311
      %v360 = vunpack.c.l.b16 %v312
      %v361 = vunpack.c.l.b16 %v313
      %v362 = vunpack.c.l.b16 %v314
      %v363 = vunpack.c.l.b16 %v315
      %v364 = vunpack.c.l.b16 %v316
      %v365 = vunpack.c.l.b16 %v317
      %v366 = vunpack.c.l.b16 %v318
      %v367 = vunpack.c.l.b16 %v319
      %v368 = vunpack.c.l.b16 %v320
      %v369 = vunpack.c.l.b16 %v321
      %v370 = vpack.c.b16 %v355, %v354
      %v371 = vpack.c.b16 %v357, %v356
      %v372 = vpack.c.b16 %v359, %v358
      %v373 = vpack.c.b16 %v361, %v360
      %v374 = vpack.c.b16 %v363, %v362
      %v375 = vpack.c.b16 %v365, %v364
      %v376 = vpack.c.b16 %v367, %v366
      %v377 = vpack.c.b16 %v369, %v368
      %v402 = vunpack.c.l.b16 %v322
      %v403 = vunpack.c.l.b16 %v323
      %v404 = vunpack.c.l.b16 %v324
      %v405 = vunpack.c.l.b16 %v325
      %v406 = vunpack.c.l.b16 %v326
      %v407 = vunpack.c.l.b16 %v327
      %v408 = vunpack.c.l.b16 %v328
      %v409 = vunpack.c.l.b16 %v329
      %v410 = vunpack.c.l.b16 %v330
      %v411 = vunpack.c.l.b16 %v331
      %v412 = vunpack.c.l.b16 %v332
      %v413 = vunpack.c.l.b16 %v333
      %v414 = vunpack.c.l.b16 %v334
      %v415 = vunpack.c.l.b16 %v335
      %v416 = vunpack.c.l.b16 %v336
      %v417 = vunpack.c.l.b16 %v337
      %v418 = vpack.c.b16 %v403, %v402
      %v419 = vpack.c.b16 %v405, %v404
      %v420 = vpack.c.b16 %v407, %v406
      %v421 = vpack.c.b16 %v409, %v408
      %v422 = vpack.c.b16 %v411, %v410
      %v423 = vpack.c.b16 %v413, %v412
      %v424 = vpack.c.b16 %v415, %v414
      %v425 = vpack.c.b16 %v417, %v416
      %434 = vmatprep.subr.bf16.mxu0 0
      %435 = vmatpush1.bf16.msra.mxu0 %v418
      %436 = vmatprep.subr.bf16.mxu0 0
      %437 = vmatpush1.bf16.msra.mxu0 %v419
      %438 = vmatprep.subr.bf16.mxu0 0
      %439 = vmatpush1.bf16.msra.mxu0 %v420
      %440 = vmatprep.subr.bf16.mxu0 0
      %441 = vmatpush1.bf16.msra.mxu0 %v421
      %442 = vmatprep.subr.bf16.mxu0 0
      %443 = vmatpush1.bf16.msra.mxu0 %v422
      %444 = vmatprep.subr.bf16.mxu0 0
      %445 = vmatpush1.bf16.msra.mxu0 %v423
      %446 = vmatprep.subr.bf16.mxu0 0
      %447 = vmatpush1.bf16.msra.mxu0 %v424
      %448 = vmatprep.subr.bf16.mxu0 0
      %449 = vmatpush1.bf16.msra.mxu0 %v425
      %450 = vmatprep.subr.bf16.mxu0 0
      %451 = vmatpush1.bf16.msra.mxu0 0
      %452 = vmatprep.subr.bf16.mxu0 0
      %453 = vmatpush1.bf16.msra.mxu0 0
      %454 = vmatprep.subr.bf16.mxu0 0
      %455 = vmatpush1.bf16.msra.mxu0 0
      %456 = vmatprep.subr.bf16.mxu0 0
      %457 = vmatpush1.bf16.msra.mxu0 0
      %458 = vmatprep.subr.bf16.mxu0 0
      %459 = vmatpush1.bf16.msra.mxu0 0
      %460 = vmatprep.subr.bf16.mxu0 0
      %461 = vmatpush1.bf16.msra.mxu0 0
      %462 = vmatprep.subr.bf16.mxu0 0
      %463 = vmatpush1.bf16.msra.mxu0 0
      %464 = vmatprep.subr.bf16.mxu0 0
      %465 = vmatpush1.bf16.msra.mxu0 0
      %466 = vmatprep.mubr.bf16.mxu0 0
      %467 = vmatmul.mubr.bf16.gmra.mrb[0].mxu0 %v370
      %v468 = vpop.f32.mrb[0].mxu0
      %v469 = vadd.f32 0.0, %v468
      %v470 = vpop.f32.mrb[0].mxu0
      %v471 = vpop.f32.mrb[0].mxu0
      %v472 = vadd.f32 0.0, %v471
      %v473 = vpop.f32.mrb[0].mxu0
      %474 = vmatprep.mubr.bf16.mxu0 0
      %475 = vmatmul.mubr.bf16.gmra.mrb[0].mxu0 %v371
      %v476 = vpop.f32.mrb[0].mxu0
      %v477 = vadd.f32 0.0, %v476
      %v478 = vpop.f32.mrb[0].mxu0
      %v479 = vpop.f32.mrb[0].mxu0
      %v480 = vadd.f32 0.0, %v479
      %v481 = vpop.f32.mrb[0].mxu0
      %482 = vmatprep.mubr.bf16.mxu0 0
      %483 = vmatmul.mubr.bf16.gmra.mrb[0].mxu0 %v372
      %v484 = vpop.f32.mrb[0].mxu0
      %v485 = vadd.f32 0.0, %v484
      %v486 = vpop.f32.mrb[0].mxu0
      %v487 = vpop.f32.mrb[0].mxu0
      %v488 = vadd.f32 0.0, %v487
      %v489 = vpop.f32.mrb[0].mxu0
      %490 = vmatprep.mubr.bf16.mxu0 0
      %491 = vmatmul.mubr.bf16.gmra.mrb[0].mxu0 %v373
      %v492 = vpop.f32.mrb[0].mxu0
      %v493 = vadd.f32 0.0, %v492
      %v494 = vpop.f32.mrb[0].mxu0
      %v495 = vpop.f32.mrb[0].mxu0
      %v496 = vadd.f32 0.0, %v495
      %v497 = vpop.f32.mrb[0].mxu0
      %498 = vmatprep.mubr.bf16.mxu0 0
      %499 = vmatmul.mubr.bf16.gmra.mrb[0].mxu0 %v374
      %v500 = vpop.f32.mrb[0].mxu0
      %v501 = vadd.f32 0.0, %v500
      %v502 = vpop.f32.mrb[0].mxu0
      %v503 = vpop.f32.mrb[0].mxu0
      %v504 = vadd.f32 0.0, %v503
      %v505 = vpop.f32.mrb[0].mxu0
      %506 = vmatprep.mubr.bf16.mxu0 0
      %507 = vmatmul.mubr.bf16.gmra.mrb[0].mxu0 %v375
      %v508 = vpop.f32.mrb[0].mxu0
      %v509 = vadd.f32 0.0, %v508
      %v510 = vpop.f32.mrb[0].mxu0
      %v511 = vpop.f32.mrb[0].mxu0
      %v512 = vadd.f32 0.0, %v511
      %v513 = vpop.f32.mrb[0].mxu0
      %514 = vmatprep.mubr.bf16.mxu0 0
      %515 = vmatmul.mubr.bf16.gmra.mrb[0].mxu0 %v376
      %v516 = vpop.f32.mrb[0].mxu0
      %v517 = vadd.f32 0.0, %v516
      %v518 = vpop.f32.mrb[0].mxu0
      %v519 = vpop.f32.mrb[0].mxu0
      %v520 = vadd.f32 0.0, %v519
      %v521 = vpop.f32.mrb[0].mxu0
      %522 = vmatprep.mubr.bf16.mxu0 0
      %523 = vmatmul.mubr.bf16.gmra.mrb[0].mxu0 %v377
      %v524 = vpop.f32.mrb[0].mxu0
      %v525 = vadd.f32 0.0, %v524
      %v526 = vpop.f32.mrb[0].mxu0
      %v527 = vpop.f32.mrb[0].mxu0
      %v528 = vadd.f32 0.0, %v527
      %v529 = vpop.f32.mrb[0].mxu0
      %530 = vdwg.mxu0
      %v531 = vld [vmem:[%s287] sm:$0xf]
      %v532 = vld [vmem:[%s287 + $0x4] sm:$0xf]
      %v533 = vld [vmem:[%s287 + $0x8] sm:$0xf]
      %v534 = vld [vmem:[%s287 + $0xc] sm:$0xf]
      %v535 = vld [vmem:[%s287 + $0x10] sm:$0xf]
      %v536 = vld [vmem:[%s287 + $0x14] sm:$0xf]
      %v537 = vld [vmem:[%s287 + $0x18] sm:$0xf]
      %v538 = vld [vmem:[%s287 + $0x1c] sm:$0xf]
      %v539 = vld [vmem:[%s287 + $0x20] sm:$0xf]
      %v540 = vld [vmem:[%s287 + $0x24] sm:$0xf]
      %v541 = vld [vmem:[%s287 + $0x28] sm:$0xf]
      %v542 = vld [vmem:[%s287 + $0x2c] sm:$0xf]
      %v543 = vld [vmem:[%s287 + $0x30] sm:$0xf]
      %v544 = vld [vmem:[%s287 + $0x34] sm:$0xf]
      %v545 = vld [vmem:[%s287 + $0x38] sm:$0xf]
      %v546 = vld [vmem:[%s287 + $0x3c] sm:$0xf]
      %v547 = vpack.c.bf16 %v472, %v469
      %v548 = vpack.c.bf16 %v480, %v477
      %v549 = vpack.c.bf16 %v488, %v485
      %v550 = vpack.c.bf16 %v496, %v493
      %v551 = vpack.c.bf16 %v504, %v501
      %v552 = vpack.c.bf16 %v512, %v509
      %v553 = vpack.c.bf16 %v520, %v517
      %v554 = vpack.c.bf16 %v528, %v525
      %v555 = vld [vmem:[%s5] sm:$0x1]
      %v556 = vlaneseq
      %v557 = vshrl.u32 %v556, 7
      %v558 = vsub.s32 0, %v557
      %v559 = vrot.slane %v555, %v558
      %v576 = vunpack.c.l.b16 %v531
      %v577 = vunpack.c.l.b16 %v532
      %v578 = vunpack.c.l.b16 %v533
      %v579 = vunpack.c.l.b16 %v534
      %v580 = vunpack.c.l.b16 %v535
      %v581 = vunpack.c.l.b16 %v536
      %v582 = vunpack.c.l.b16 %v537
      %v583 = vunpack.c.l.b16 %v538
      %v584 = vunpack.c.l.b16 %v539
      %v585 = vunpack.c.l.b16 %v540
      %v586 = vunpack.c.l.b16 %v541
      %v587 = vunpack.c.l.b16 %v542
      %v588 = vunpack.c.l.b16 %v543
      %v589 = vunpack.c.l.b16 %v544
      %v590 = vunpack.c.l.b16 %v545
      %v591 = vunpack.c.l.b16 %v546
      %v592 = vpack.c.b16 %v577, %v576
      %v593 = vpack.c.b16 %v579, %v578
      %v594 = vpack.c.b16 %v581, %v580
      %v595 = vpack.c.b16 %v583, %v582
      %v596 = vpack.c.b16 %v585, %v584
      %v597 = vpack.c.b16 %v587, %v586
      %v598 = vpack.c.b16 %v589, %v588
      %v599 = vpack.c.b16 %v591, %v590
      %608 = vmatprep.subr.bf16.mxu0 0
      %609 = vmatpush1.bf16.msra.mxu0 %v547
      %610 = vmatprep.subr.bf16.mxu0 0
      %611 = vmatpush1.bf16.msra.mxu0 %v548
      %612 = vmatprep.subr.bf16.mxu0 0
      %613 = vmatpush1.bf16.msra.mxu0 %v549
      %614 = vmatprep.subr.bf16.mxu0 0
      %615 = vmatpush1.bf16.msra.mxu0 %v550
      %616 = vmatprep.subr.bf16.mxu0 0
      %617 = vmatpush1.bf16.msra.mxu0 %v551
      %618 = vmatprep.subr.bf16.mxu0 0
      %619 = vmatpush1.bf16.msra.mxu0 %v552
      %620 = vmatprep.subr.bf16.mxu0 0
      %621 = vmatpush1.bf16.msra.mxu0 %v553
      %622 = vmatprep.subr.bf16.mxu0 0
      %623 = vmatpush1.bf16.msra.mxu0 %v554
      %624 = vmatprep.subr.bf16.mxu0 0
      %625 = vmatpush1.bf16.msra.mxu0 0
      %626 = vmatprep.subr.bf16.mxu0 0
      %627 = vmatpush1.bf16.msra.mxu0 0
      %628 = vmatprep.subr.bf16.mxu0 0
      %629 = vmatpush1.bf16.msra.mxu0 0
      %630 = vmatprep.subr.bf16.mxu0 0
      %631 = vmatpush1.bf16.msra.mxu0 0
      %632 = vmatprep.subr.bf16.mxu0 0
      %633 = vmatpush1.bf16.msra.mxu0 0
      %634 = vmatprep.subr.bf16.mxu0 0
      %635 = vmatpush1.bf16.msra.mxu0 0
      %636 = vmatprep.subr.bf16.mxu0 0
      %637 = vmatpush1.bf16.msra.mxu0 0
      %638 = vmatprep.subr.bf16.mxu0 0
      %639 = vmatpush1.bf16.msra.mxu0 0
      %640 = vmatprep.mubr.bf16.mxu0 0
      %641 = vmatmul.mubr.bf16.gmra.mrb[0].mxu0 %v592
      %v642 = vpop.f32.mrb[0].mxu0
      %v643 = vadd.f32 %v559, %v642
      %v644 = vpop.f32.mrb[0].mxu0
      %v645 = vpop.f32.mrb[0].mxu0
      %v646 = vadd.f32 %v559, %v645
      %v647 = vpop.f32.mrb[0].mxu0
      %648 = vmatprep.mubr.bf16.mxu0 0
      %649 = vmatmul.mubr.bf16.gmra.mrb[0].mxu0 %v593
      %v650 = vpop.f32.mrb[0].mxu0
      %v651 = vadd.f32 %v559, %v650
      %v652 = vpop.f32.mrb[0].mxu0
      %v653 = vpop.f32.mrb[0].mxu0
      %v654 = vadd.f32 %v559, %v653
      %v655 = vpop.f32.mrb[0].mxu0
      %656 = vmatprep.mubr.bf16.mxu0 0
      %657 = vmatmul.mubr.bf16.gmra.mrb[0].mxu0 %v594
      %v658 = vpop.f32.mrb[0].mxu0
      %v659 = vadd.f32 %v559, %v658
      %v660 = vpop.f32.mrb[0].mxu0
      %v661 = vpop.f32.mrb[0].mxu0
      %v662 = vadd.f32 %v559, %v661
      %v663 = vpop.f32.mrb[0].mxu0
      %664 = vmatprep.mubr.bf16.mxu0 0
      %665 = vmatmul.mubr.bf16.gmra.mrb[0].mxu0 %v595
      %v666 = vpop.f32.mrb[0].mxu0
      %v667 = vadd.f32 %v559, %v666
      %v668 = vpop.f32.mrb[0].mxu0
      %v669 = vpop.f32.mrb[0].mxu0
      %v670 = vadd.f32 %v559, %v669
      %v671 = vpop.f32.mrb[0].mxu0
      %672 = vmatprep.mubr.bf16.mxu0 0
      %673 = vmatmul.mubr.bf16.gmra.mrb[0].mxu0 %v596
      %v674 = vpop.f32.mrb[0].mxu0
      %v675 = vadd.f32 %v559, %v674
      %v676 = vpop.f32.mrb[0].mxu0
      %v677 = vpop.f32.mrb[0].mxu0
      %v678 = vadd.f32 %v559, %v677
      %v679 = vpop.f32.mrb[0].mxu0
      %680 = vmatprep.mubr.bf16.mxu0 0
      %681 = vmatmul.mubr.bf16.gmra.mrb[0].mxu0 %v597
      %v682 = vpop.f32.mrb[0].mxu0
      %v683 = vadd.f32 %v559, %v682
      %v684 = vpop.f32.mrb[0].mxu0
      %v685 = vpop.f32.mrb[0].mxu0
      %v686 = vadd.f32 %v559, %v685
      %v687 = vpop.f32.mrb[0].mxu0
      %688 = vmatprep.mubr.bf16.mxu0 0
      %689 = vmatmul.mubr.bf16.gmra.mrb[0].mxu0 %v598
      %v690 = vpop.f32.mrb[0].mxu0
      %v691 = vadd.f32 %v559, %v690
      %v692 = vpop.f32.mrb[0].mxu0
      %v693 = vpop.f32.mrb[0].mxu0
      %v694 = vadd.f32 %v559, %v693
      %v695 = vpop.f32.mrb[0].mxu0
      %696 = vmatprep.mubr.bf16.mxu0 0
      %697 = vmatmul.mubr.bf16.gmra.mrb[0].mxu0 %v599
      %v698 = vpop.f32.mrb[0].mxu0
      %v699 = vadd.f32 %v559, %v698
      %v700 = vpop.f32.mrb[0].mxu0
      %v701 = vpop.f32.mrb[0].mxu0
      %v702 = vadd.f32 %v559, %v701
      %v703 = vpop.f32.mrb[0].mxu0
      %704 = vdwg.mxu0
      %v705 = vmax.f32 %v643, 0.0
      %v706 = vmax.f32 %v646, 0.0
      %v707 = vmax.f32 %v651, 0.0
      %v708 = vmax.f32 %v654, 0.0
      %v709 = vmax.f32 %v659, 0.0
      %v710 = vmax.f32 %v662, 0.0
      %v711 = vmax.f32 %v667, 0.0
      %v712 = vmax.f32 %v670, 0.0
      %v713 = vmax.f32 %v675, 0.0
      %v714 = vmax.f32 %v678, 0.0
      %v715 = vmax.f32 %v683, 0.0
      %v716 = vmax.f32 %v686, 0.0
      %v717 = vmax.f32 %v691, 0.0
      %v718 = vmax.f32 %v694, 0.0
      %v719 = vmax.f32 %v699, 0.0
      %v720 = vmax.f32 %v702, 0.0
      %v721 = vpack.c.bf16 %v706, %v705
      %v722 = vpack.c.bf16 %v708, %v707
      %v723 = vpack.c.bf16 %v710, %v709
      %v724 = vpack.c.bf16 %v712, %v711
      %v725 = vpack.c.bf16 %v714, %v713
      %v726 = vpack.c.bf16 %v716, %v715
      %v727 = vpack.c.bf16 %v718, %v717
      %v728 = vpack.c.bf16 %v720, %v719
      %s729 = scalar_lea.vmem %s4, 64
      %v730 = vld [vmem:[%s729] sm:$0xf]
      %v731 = vld [vmem:[%s729 + $0x4] sm:$0xf]
      %v732 = vld [vmem:[%s729 + $0x8] sm:$0xf]
      %v733 = vld [vmem:[%s729 + $0xc] sm:$0xf]
      %v734 = vld [vmem:[%s729 + $0x10] sm:$0xf]
      %v735 = vld [vmem:[%s729 + $0x14] sm:$0xf]
      %v736 = vld [vmem:[%s729 + $0x18] sm:$0xf]
      %v737 = vld [vmem:[%s729 + $0x1c] sm:$0xf]
      %v738 = vld [vmem:[%s729 + $0x20] sm:$0xf]
      %v739 = vld [vmem:[%s729 + $0x24] sm:$0xf]
      %v740 = vld [vmem:[%s729 + $0x28] sm:$0xf]
      %v741 = vld [vmem:[%s729 + $0x2c] sm:$0xf]
      %v742 = vld [vmem:[%s729 + $0x30] sm:$0xf]
      %v743 = vld [vmem:[%s729 + $0x34] sm:$0xf]
      %v744 = vld [vmem:[%s729 + $0x38] sm:$0xf]
      %v745 = vld [vmem:[%s729 + $0x3c] sm:$0xf]
      %v762 = vunpack.c.l.b16 %v730
      %v763 = vunpack.c.l.b16 %v731
      %v764 = vunpack.c.l.b16 %v732
      %v765 = vunpack.c.l.b16 %v733
      %v766 = vunpack.c.l.b16 %v734
      %v767 = vunpack.c.l.b16 %v735
      %v768 = vunpack.c.l.b16 %v736
      %v769 = vunpack.c.l.b16 %v737
      %v770 = vunpack.c.l.b16 %v738
      %v771 = vunpack.c.l.b16 %v739
      %v772 = vunpack.c.l.b16 %v740
      %v773 = vunpack.c.l.b16 %v741
      %v774 = vunpack.c.l.b16 %v742
      %v775 = vunpack.c.l.b16 %v743
      %v776 = vunpack.c.l.b16 %v744
      %v777 = vunpack.c.l.b16 %v745
      %v778 = vpack.c.b16 %v763, %v762
      %v779 = vpack.c.b16 %v765, %v764
      %v780 = vpack.c.b16 %v767, %v766
      %v781 = vpack.c.b16 %v769, %v768
      %v782 = vpack.c.b16 %v771, %v770
      %v783 = vpack.c.b16 %v773, %v772
      %v784 = vpack.c.b16 %v775, %v774
      %v785 = vpack.c.b16 %v777, %v776
      %794 = vmatprep.subr.bf16.mxu0 0
      %795 = vmatpush1.bf16.msra.mxu0 %v778
      %796 = vmatprep.subr.bf16.mxu0 0
      %797 = vmatpush1.bf16.msra.mxu0 %v779
      %798 = vmatprep.subr.bf16.mxu0 0
      %799 = vmatpush1.bf16.msra.mxu0 %v780
      %800 = vmatprep.subr.bf16.mxu0 0
      %801 = vmatpush1.bf16.msra.mxu0 %v781
      %802 = vmatprep.subr.bf16.mxu0 0
      %803 = vmatpush1.bf16.msra.mxu0 %v782
      %804 = vmatprep.subr.bf16.mxu0 0
      %805 = vmatpush1.bf16.msra.mxu0 %v783
      %806 = vmatprep.subr.bf16.mxu0 0
      %807 = vmatpush1.bf16.msra.mxu0 %v784
      %808 = vmatprep.subr.bf16.mxu0 0
      %809 = vmatpush1.bf16.msra.mxu0 %v785
      %810 = vmatprep.subr.bf16.mxu0 0
      %811 = vmatpush1.bf16.msra.mxu0 0
      %812 = vmatprep.subr.bf16.mxu0 0
      %813 = vmatpush1.bf16.msra.mxu0 0
      %814 = vmatprep.subr.bf16.mxu0 0
      %815 = vmatpush1.bf16.msra.mxu0 0
      %816 = vmatprep.subr.bf16.mxu0 0
      %817 = vmatpush1.bf16.msra.mxu0 0
      %818 = vmatprep.subr.bf16.mxu0 0
      %819 = vmatpush1.bf16.msra.mxu0 0
      %820 = vmatprep.subr.bf16.mxu0 0
      %821 = vmatpush1.bf16.msra.mxu0 0
      %822 = vmatprep.subr.bf16.mxu0 0
      %823 = vmatpush1.bf16.msra.mxu0 0
      %824 = vmatprep.subr.bf16.mxu0 0
      %825 = vmatpush1.bf16.msra.mxu0 0
      %826 = vmatprep.mubr.bf16.mxu0 0
      %827 = vmatmul.mubr.bf16.gmra.mrb[0].mxu0 %v721
      %v828 = vpop.f32.mrb[0].mxu0
      %v829 = vadd.f32 0.0, %v828
      %v830 = vpop.f32.mrb[0].mxu0
      %v831 = vpop.f32.mrb[0].mxu0
      %v832 = vadd.f32 0.0, %v831
      %v833 = vpop.f32.mrb[0].mxu0
      %834 = vmatprep.mubr.bf16.mxu0 0
      %835 = vmatmul.mubr.bf16.gmra.mrb[0].mxu0 %v722
      %v836 = vpop.f32.mrb[0].mxu0
      %v837 = vadd.f32 0.0, %v836
      %v838 = vpop.f32.mrb[0].mxu0
      %v839 = vpop.f32.mrb[0].mxu0
      %v840 = vadd.f32 0.0, %v839
      %v841 = vpop.f32.mrb[0].mxu0
      %842 = vmatprep.mubr.bf16.mxu0 0
      %843 = vmatmul.mubr.bf16.gmra.mrb[0].mxu0 %v723
      %v844 = vpop.f32.mrb[0].mxu0
      %v845 = vadd.f32 0.0, %v844
      %v846 = vpop.f32.mrb[0].mxu0
      %v847 = vpop.f32.mrb[0].mxu0
      %v848 = vadd.f32 0.0, %v847
      %v849 = vpop.f32.mrb[0].mxu0
      %850 = vmatprep.mubr.bf16.mxu0 0
      %851 = vmatmul.mubr.bf16.gmra.mrb[0].mxu0 %v724
      %v852 = vpop.f32.mrb[0].mxu0
      %v853 = vadd.f32 0.0, %v852
      %v854 = vpop.f32.mrb[0].mxu0
      %v855 = vpop.f32.mrb[0].mxu0
      %v856 = vadd.f32 0.0, %v855
      %v857 = vpop.f32.mrb[0].mxu0
      %858 = vmatprep.mubr.bf16.mxu0 0
      %859 = vmatmul.mubr.bf16.gmra.mrb[0].mxu0 %v725
      %v860 = vpop.f32.mrb[0].mxu0
      %v861 = vadd.f32 0.0, %v860
      %v862 = vpop.f32.mrb[0].mxu0
      %v863 = vpop.f32.mrb[0].mxu0
      %v864 = vadd.f32 0.0, %v863
      %v865 = vpop.f32.mrb[0].mxu0
      %866 = vmatprep.mubr.bf16.mxu0 0
      %867 = vmatmul.mubr.bf16.gmra.mrb[0].mxu0 %v726
      %v868 = vpop.f32.mrb[0].mxu0
      %v869 = vadd.f32 0.0, %v868
      %v870 = vpop.f32.mrb[0].mxu0
      %v871 = vpop.f32.mrb[0].mxu0
      %v872 = vadd.f32 0.0, %v871
      %v873 = vpop.f32.mrb[0].mxu0
      %874 = vmatprep.mubr.bf16.mxu0 0
      %875 = vmatmul.mubr.bf16.gmra.mrb[0].mxu0 %v727
      %v876 = vpop.f32.mrb[0].mxu0
      %v877 = vadd.f32 0.0, %v876
      %v878 = vpop.f32.mrb[0].mxu0
      %v879 = vpop.f32.mrb[0].mxu0
      %v880 = vadd.f32 0.0, %v879
      %v881 = vpop.f32.mrb[0].mxu0
      %882 = vmatprep.mubr.bf16.mxu0 0
      %883 = vmatmul.mubr.bf16.gmra.mrb[0].mxu0 %v728
      %v884 = vpop.f32.mrb[0].mxu0
      %v885 = vadd.f32 0.0, %v884
      %v886 = vpop.f32.mrb[0].mxu0
      %v887 = vpop.f32.mrb[0].mxu0
      %v888 = vadd.f32 0.0, %v887
      %v889 = vpop.f32.mrb[0].mxu0
      %890 = vdwg.mxu0
      %v891 = vpack.c.bf16 %v832, %v829
      %v892 = vpack.c.bf16 %v840, %v837
      %v893 = vpack.c.bf16 %v848, %v845
      %v894 = vpack.c.bf16 %v856, %v853
      %v895 = vpack.c.bf16 %v864, %v861
      %v896 = vpack.c.bf16 %v872, %v869
      %v897 = vpack.c.bf16 %v880, %v877
      %v898 = vpack.c.bf16 %v888, %v885
      %v899 = vld [vmem:[%s5 + $0x1] sm:$0x1]
      %v900 = vlaneseq
      %v901 = vshrl.u32 %v900, 7
      %v902 = vsub.s32 0, %v901
      %v903 = vrot.slane %v899, %v902
      %904 = vmatprep.subr.bf16.mxu0 0
      %905 = vmatpush1.bf16.msra.mxu0 %v891
      %906 = vmatprep.subr.bf16.mxu0 0
      %907 = vmatpush1.bf16.msra.mxu0 %v892
      %908 = vmatprep.subr.bf16.mxu0 0
      %909 = vmatpush1.bf16.msra.mxu0 %v893
      %910 = vmatprep.subr.bf16.mxu0 0
      %911 = vmatpush1.bf16.msra.mxu0 %v894
      %912 = vmatprep.subr.bf16.mxu0 0
      %913 = vmatpush1.bf16.msra.mxu0 %v895
      %914 = vmatprep.subr.bf16.mxu0 0
      %915 = vmatpush1.bf16.msra.mxu0 %v896
      %916 = vmatprep.subr.bf16.mxu0 0
      %917 = vmatpush1.bf16.msra.mxu0 %v897
      %918 = vmatprep.subr.bf16.mxu0 0
      %919 = vmatpush1.bf16.msra.mxu0 %v898
      %920 = vmatprep.subr.bf16.mxu0 0
      %921 = vmatpush1.bf16.msra.mxu0 0
      %922 = vmatprep.subr.bf16.mxu0 0
      %923 = vmatpush1.bf16.msra.mxu0 0
      %924 = vmatprep.subr.bf16.mxu0 0
      %925 = vmatpush1.bf16.msra.mxu0 0
      %926 = vmatprep.subr.bf16.mxu0 0
      %927 = vmatpush1.bf16.msra.mxu0 0
      %928 = vmatprep.subr.bf16.mxu0 0
      %929 = vmatpush1.bf16.msra.mxu0 0
      %930 = vmatprep.subr.bf16.mxu0 0
      %931 = vmatpush1.bf16.msra.mxu0 0
      %932 = vmatprep.subr.bf16.mxu0 0
      %933 = vmatpush1.bf16.msra.mxu0 0
      %934 = vmatprep.subr.bf16.mxu0 0
      %935 = vmatpush1.bf16.msra.mxu0 0
      %936 = vmatprep.mubr.bf16.mxu0 0
      %937 = vmatmul.mubr.bf16.gmra.mrb[0].mxu0 %v592
      %v938 = vpop.f32.mrb[0].mxu0
      %v939 = vadd.f32 %v903, %v938
      %v940 = vpop.f32.mrb[0].mxu0
      %v941 = vpop.f32.mrb[0].mxu0
      %v942 = vadd.f32 %v903, %v941
      %v943 = vpop.f32.mrb[0].mxu0
      %944 = vmatprep.mubr.bf16.mxu0 0
      %945 = vmatmul.mubr.bf16.gmra.mrb[0].mxu0 %v593
      %v946 = vpop.f32.mrb[0].mxu0
      %v947 = vadd.f32 %v903, %v946
      %v948 = vpop.f32.mrb[0].mxu0
      %v949 = vpop.f32.mrb[0].mxu0
      %v950 = vadd.f32 %v903, %v949
      %v951 = vpop.f32.mrb[0].mxu0
      %952 = vmatprep.mubr.bf16.mxu0 0
      %953 = vmatmul.mubr.bf16.gmra.mrb[0].mxu0 %v594
      %v954 = vpop.f32.mrb[0].mxu0
      %v955 = vadd.f32 %v903, %v954
      %v956 = vpop.f32.mrb[0].mxu0
      %v957 = vpop.f32.mrb[0].mxu0
      %v958 = vadd.f32 %v903, %v957
      %v959 = vpop.f32.mrb[0].mxu0
      %960 = vmatprep.mubr.bf16.mxu0 0
      %961 = vmatmul.mubr.bf16.gmra.mrb[0].mxu0 %v595
      %v962 = vpop.f32.mrb[0].mxu0
      %v963 = vadd.f32 %v903, %v962
      %v964 = vpop.f32.mrb[0].mxu0
      %v965 = vpop.f32.mrb[0].mxu0
      %v966 = vadd.f32 %v903, %v965
      %v967 = vpop.f32.mrb[0].mxu0
      %968 = vmatprep.mubr.bf16.mxu0 0
      %969 = vmatmul.mubr.bf16.gmra.mrb[0].mxu0 %v596
      %v970 = vpop.f32.mrb[0].mxu0
      %v971 = vadd.f32 %v903, %v970
      %v972 = vpop.f32.mrb[0].mxu0
      %v973 = vpop.f32.mrb[0].mxu0
      %v974 = vadd.f32 %v903, %v973
      %v975 = vpop.f32.mrb[0].mxu0
      %976 = vmatprep.mubr.bf16.mxu0 0
      %977 = vmatmul.mubr.bf16.gmra.mrb[0].mxu0 %v597
      %v978 = vpop.f32.mrb[0].mxu0
      %v979 = vadd.f32 %v903, %v978
      %v980 = vpop.f32.mrb[0].mxu0
      %v981 = vpop.f32.mrb[0].mxu0
      %v982 = vadd.f32 %v903, %v981
      %v983 = vpop.f32.mrb[0].mxu0
      %984 = vmatprep.mubr.bf16.mxu0 0
      %985 = vmatmul.mubr.bf16.gmra.mrb[0].mxu0 %v598
      %v986 = vpop.f32.mrb[0].mxu0
      %v987 = vadd.f32 %v903, %v986
      %v988 = vpop.f32.mrb[0].mxu0
      %v989 = vpop.f32.mrb[0].mxu0
      %v990 = vadd.f32 %v903, %v989
      %v991 = vpop.f32.mrb[0].mxu0
      %992 = vmatprep.mubr.bf16.mxu0 0
      %993 = vmatmul.mubr.bf16.gmra.mrb[0].mxu0 %v599
      %v994 = vpop.f32.mrb[0].mxu0
      %v995 = vadd.f32 %v903, %v994
      %v996 = vpop.f32.mrb[0].mxu0
      %v997 = vpop.f32.mrb[0].mxu0
      %v998 = vadd.f32 %v903, %v997
      %v999 = vpop.f32.mrb[0].mxu0
      %1000 = vdwg.mxu0
      %v1001 = vmax.f32 %v939, 0.0
      %v1002 = vmax.f32 %v942, 0.0
      %v1003 = vmax.f32 %v947, 0.0
      %v1004 = vmax.f32 %v950, 0.0
      %v1005 = vmax.f32 %v955, 0.0
      %v1006 = vmax.f32 %v958, 0.0
      %v1007 = vmax.f32 %v963, 0.0
      %v1008 = vmax.f32 %v966, 0.0
      %v1009 = vmax.f32 %v971, 0.0
      %v1010 = vmax.f32 %v974, 0.0
      %v1011 = vmax.f32 %v979, 0.0
      %v1012 = vmax.f32 %v982, 0.0
      %v1013 = vmax.f32 %v987, 0.0
      %v1014 = vmax.f32 %v990, 0.0
      %v1015 = vmax.f32 %v995, 0.0
      %v1016 = vmax.f32 %v998, 0.0
      %v1017 = vpack.c.bf16 %v1002, %v1001
      %v1018 = vpack.c.bf16 %v1004, %v1003
      %v1019 = vpack.c.bf16 %v1006, %v1005
      %v1020 = vpack.c.bf16 %v1008, %v1007
      %v1021 = vpack.c.bf16 %v1010, %v1009
      %v1022 = vpack.c.bf16 %v1012, %v1011
      %v1023 = vpack.c.bf16 %v1014, %v1013
      %v1024 = vpack.c.bf16 %v1016, %v1015
      %s1025 = scalar_lea.vmem %s4, 128
      %v1026 = vld [vmem:[%s1025] sm:$0xf]
      %v1027 = vld [vmem:[%s1025 + $0x4] sm:$0xf]
      %v1028 = vld [vmem:[%s1025 + $0x8] sm:$0xf]
      %v1029 = vld [vmem:[%s1025 + $0xc] sm:$0xf]
      %v1030 = vld [vmem:[%s1025 + $0x10] sm:$0xf]
      %v1031 = vld [vmem:[%s1025 + $0x14] sm:$0xf]
      %v1032 = vld [vmem:[%s1025 + $0x18] sm:$0xf]
      %v1033 = vld [vmem:[%s1025 + $0x1c] sm:$0xf]
      %v1034 = vld [vmem:[%s1025 + $0x20] sm:$0xf]
      %v1035 = vld [vmem:[%s1025 + $0x24] sm:$0xf]
      %v1036 = vld [vmem:[%s1025 + $0x28] sm:$0xf]
      %v1037 = vld [vmem:[%s1025 + $0x2c] sm:$0xf]
      %v1038 = vld [vmem:[%s1025 + $0x30] sm:$0xf]
      %v1039 = vld [vmem:[%s1025 + $0x34] sm:$0xf]
      %v1040 = vld [vmem:[%s1025 + $0x38] sm:$0xf]
      %v1041 = vld [vmem:[%s1025 + $0x3c] sm:$0xf]
      %v1058 = vunpack.c.l.b16 %v1026
      %v1059 = vunpack.c.l.b16 %v1027
      %v1060 = vunpack.c.l.b16 %v1028
      %v1061 = vunpack.c.l.b16 %v1029
      %v1062 = vunpack.c.l.b16 %v1030
      %v1063 = vunpack.c.l.b16 %v1031
      %v1064 = vunpack.c.l.b16 %v1032
      %v1065 = vunpack.c.l.b16 %v1033
      %v1066 = vunpack.c.l.b16 %v1034
      %v1067 = vunpack.c.l.b16 %v1035
      %v1068 = vunpack.c.l.b16 %v1036
      %v1069 = vunpack.c.l.b16 %v1037
      %v1070 = vunpack.c.l.b16 %v1038
      %v1071 = vunpack.c.l.b16 %v1039
      %v1072 = vunpack.c.l.b16 %v1040
      %v1073 = vunpack.c.l.b16 %v1041
      %v1074 = vpack.c.b16 %v1059, %v1058
      %v1075 = vpack.c.b16 %v1061, %v1060
      %v1076 = vpack.c.b16 %v1063, %v1062
      %v1077 = vpack.c.b16 %v1065, %v1064
      %v1078 = vpack.c.b16 %v1067, %v1066
      %v1079 = vpack.c.b16 %v1069, %v1068
      %v1080 = vpack.c.b16 %v1071, %v1070
      %v1081 = vpack.c.b16 %v1073, %v1072
      %1090 = vmatprep.subr.bf16.mxu0 0
      %1091 = vmatpush1.bf16.msra.mxu0 %v1074
      %1092 = vmatprep.subr.bf16.mxu0 0
      %1093 = vmatpush1.bf16.msra.mxu0 %v1075
      %1094 = vmatprep.subr.bf16.mxu0 0
      %1095 = vmatpush1.bf16.msra.mxu0 %v1076
      %1096 = vmatprep.subr.bf16.mxu0 0
      %1097 = vmatpush1.bf16.msra.mxu0 %v1077
      %1098 = vmatprep.subr.bf16.mxu0 0
      %1099 = vmatpush1.bf16.msra.mxu0 %v1078
      %1100 = vmatprep.subr.bf16.mxu0 0
      %1101 = vmatpush1.bf16.msra.mxu0 %v1079
      %1102 = vmatprep.subr.bf16.mxu0 0
      %1103 = vmatpush1.bf16.msra.mxu0 %v1080
      %1104 = vmatprep.subr.bf16.mxu0 0
      %1105 = vmatpush1.bf16.msra.mxu0 %v1081
      %1106 = vmatprep.subr.bf16.mxu0 0
      %1107 = vmatpush1.bf16.msra.mxu0 0
      %1108 = vmatprep.subr.bf16.mxu0 0
      %1109 = vmatpush1.bf16.msra.mxu0 0
      %1110 = vmatprep.subr.bf16.mxu0 0
      %1111 = vmatpush1.bf16.msra.mxu0 0
      %1112 = vmatprep.subr.bf16.mxu0 0
      %1113 = vmatpush1.bf16.msra.mxu0 0
      %1114 = vmatprep.subr.bf16.mxu0 0
      %1115 = vmatpush1.bf16.msra.mxu0 0
      %1116 = vmatprep.subr.bf16.mxu0 0
      %1117 = vmatpush1.bf16.msra.mxu0 0
      %1118 = vmatprep.subr.bf16.mxu0 0
      %1119 = vmatpush1.bf16.msra.mxu0 0
      %1120 = vmatprep.subr.bf16.mxu0 0
      %1121 = vmatpush1.bf16.msra.mxu0 0
      %1122 = vmatprep.mubr.bf16.mxu0 0
      %1123 = vmatmul.mubr.bf16.gmra.mrb[0].mxu0 %v1017
      %v1124 = vpop.f32.mrb[0].mxu0
      %v1125 = vadd.f32 0.0, %v1124
      %v1126 = vpop.f32.mrb[0].mxu0
      %v1127 = vpop.f32.mrb[0].mxu0
      %v1128 = vadd.f32 0.0, %v1127
      %v1129 = vpop.f32.mrb[0].mxu0
      %1130 = vmatprep.mubr.bf16.mxu0 0
      %1131 = vmatmul.mubr.bf16.gmra.mrb[0].mxu0 %v1018
      %v1132 = vpop.f32.mrb[0].mxu0
      %v1133 = vadd.f32 0.0, %v1132
      %v1134 = vpop.f32.mrb[0].mxu0
      %v1135 = vpop.f32.mrb[0].mxu0
      %v1136 = vadd.f32 0.0, %v1135
      %v1137 = vpop.f32.mrb[0].mxu0
      %1138 = vmatprep.mubr.bf16.mxu0 0
      %1139 = vmatmul.mubr.bf16.gmra.mrb[0].mxu0 %v1019
      %v1140 = vpop.f32.mrb[0].mxu0
      %v1141 = vadd.f32 0.0, %v1140
      %v1142 = vpop.f32.mrb[0].mxu0
      %v1143 = vpop.f32.mrb[0].mxu0
      %v1144 = vadd.f32 0.0, %v1143
      %v1145 = vpop.f32.mrb[0].mxu0
      %1146 = vmatprep.mubr.bf16.mxu0 0
      %1147 = vmatmul.mubr.bf16.gmra.mrb[0].mxu0 %v1020
      %v1148 = vpop.f32.mrb[0].mxu0
      %v1149 = vadd.f32 0.0, %v1148
      %v1150 = vpop.f32.mrb[0].mxu0
      %v1151 = vpop.f32.mrb[0].mxu0
      %v1152 = vadd.f32 0.0, %v1151
      %v1153 = vpop.f32.mrb[0].mxu0
      %1154 = vmatprep.mubr.bf16.mxu0 0
      %1155 = vmatmul.mubr.bf16.gmra.mrb[0].mxu0 %v1021
      %v1156 = vpop.f32.mrb[0].mxu0
      %v1157 = vadd.f32 0.0, %v1156
      %v1158 = vpop.f32.mrb[0].mxu0
      %v1159 = vpop.f32.mrb[0].mxu0
      %v1160 = vadd.f32 0.0, %v1159
      %v1161 = vpop.f32.mrb[0].mxu0
      %1162 = vmatprep.mubr.bf16.mxu0 0
      %1163 = vmatmul.mubr.bf16.gmra.mrb[0].mxu0 %v1022
      %v1164 = vpop.f32.mrb[0].mxu0
      %v1165 = vadd.f32 0.0, %v1164
      %v1166 = vpop.f32.mrb[0].mxu0
      %v1167 = vpop.f32.mrb[0].mxu0
      %v1168 = vadd.f32 0.0, %v1167
      %v1169 = vpop.f32.mrb[0].mxu0
      %1170 = vmatprep.mubr.bf16.mxu0 0
      %1171 = vmatmul.mubr.bf16.gmra.mrb[0].mxu0 %v1023
      %v1172 = vpop.f32.mrb[0].mxu0
      %v1173 = vadd.f32 0.0, %v1172
      %v1174 = vpop.f32.mrb[0].mxu0
      %v1175 = vpop.f32.mrb[0].mxu0
      %v1176 = vadd.f32 0.0, %v1175
      %v1177 = vpop.f32.mrb[0].mxu0
      %1178 = vmatprep.mubr.bf16.mxu0 0
      %1179 = vmatmul.mubr.bf16.gmra.mrb[0].mxu0 %v1024
      %v1180 = vpop.f32.mrb[0].mxu0
      %v1181 = vadd.f32 0.0, %v1180
      %v1182 = vpop.f32.mrb[0].mxu0
      %v1183 = vpop.f32.mrb[0].mxu0
      %v1184 = vadd.f32 0.0, %v1183
      %v1185 = vpop.f32.mrb[0].mxu0
      %1186 = vdwg.mxu0
      %v1187 = vpack.c.bf16 %v1128, %v1125
      %v1188 = vpack.c.bf16 %v1136, %v1133
      %v1189 = vpack.c.bf16 %v1144, %v1141
      %v1190 = vpack.c.bf16 %v1152, %v1149
      %v1191 = vpack.c.bf16 %v1160, %v1157
      %v1192 = vpack.c.bf16 %v1168, %v1165
      %v1193 = vpack.c.bf16 %v1176, %v1173
      %v1194 = vpack.c.bf16 %v1184, %v1181
      %v1195 = vld [vmem:[%s5 + $0x2] sm:$0x1]
      %v1196 = vlaneseq
      %v1197 = vshrl.u32 %v1196, 7
      %v1198 = vsub.s32 0, %v1197
      %v1199 = vrot.slane %v1195, %v1198
      %1200 = vmatprep.subr.bf16.mxu0 0
      %1201 = vmatpush1.bf16.msra.mxu0 %v1187
      %1202 = vmatprep.subr.bf16.mxu0 0
      %1203 = vmatpush1.bf16.msra.mxu0 %v1188
      %1204 = vmatprep.subr.bf16.mxu0 0
      %1205 = vmatpush1.bf16.msra.mxu0 %v1189
      %1206 = vmatprep.subr.bf16.mxu0 0
      %1207 = vmatpush1.bf16.msra.mxu0 %v1190
      %1208 = vmatprep.subr.bf16.mxu0 0
      %1209 = vmatpush1.bf16.msra.mxu0 %v1191
      %1210 = vmatprep.subr.bf16.mxu0 0
      %1211 = vmatpush1.bf16.msra.mxu0 %v1192
      %1212 = vmatprep.subr.bf16.mxu0 0
      %1213 = vmatpush1.bf16.msra.mxu0 %v1193
      %1214 = vmatprep.subr.bf16.mxu0 0
      %1215 = vmatpush1.bf16.msra.mxu0 %v1194
      %1216 = vmatprep.subr.bf16.mxu0 0
      %1217 = vmatpush1.bf16.msra.mxu0 0
      %1218 = vmatprep.subr.bf16.mxu0 0
      %1219 = vmatpush1.bf16.msra.mxu0 0
      %1220 = vmatprep.subr.bf16.mxu0 0
      %1221 = vmatpush1.bf16.msra.mxu0 0
      %1222 = vmatprep.subr.bf16.mxu0 0
      %1223 = vmatpush1.bf16.msra.mxu0 0
      %1224 = vmatprep.subr.bf16.mxu0 0
      %1225 = vmatpush1.bf16.msra.mxu0 0
      %1226 = vmatprep.subr.bf16.mxu0 0
      %1227 = vmatpush1.bf16.msra.mxu0 0
      %1228 = vmatprep.subr.bf16.mxu0 0
      %1229 = vmatpush1.bf16.msra.mxu0 0
      %1230 = vmatprep.subr.bf16.mxu0 0
      %1231 = vmatpush1.bf16.msra.mxu0 0
      %1232 = vmatprep.mubr.bf16.mxu0 0
      %1233 = vmatmul.mubr.bf16.gmra.mrb[0].mxu0 %v592
      %v1234 = vpop.f32.mrb[0].mxu0
      %v1235 = vadd.f32 %v1199, %v1234
      %v1236 = vpop.f32.mrb[0].mxu0
      %v1237 = vpop.f32.mrb[0].mxu0
      %v1238 = vadd.f32 %v1199, %v1237
      %v1239 = vpop.f32.mrb[0].mxu0
      %1240 = vmatprep.mubr.bf16.mxu0 0
      %1241 = vmatmul.mubr.bf16.gmra.mrb[0].mxu0 %v593
      %v1242 = vpop.f32.mrb[0].mxu0
      %v1243 = vadd.f32 %v1199, %v1242
      %v1244 = vpop.f32.mrb[0].mxu0
      %v1245 = vpop.f32.mrb[0].mxu0
      %v1246 = vadd.f32 %v1199, %v1245
      %v1247 = vpop.f32.mrb[0].mxu0
      %1248 = vmatprep.mubr.bf16.mxu0 0
      %1249 = vmatmul.mubr.bf16.gmra.mrb[0].mxu0 %v594
      %v1250 = vpop.f32.mrb[0].mxu0
      %v1251 = vadd.f32 %v1199, %v1250
      %v1252 = vpop.f32.mrb[0].mxu0
      %v1253 = vpop.f32.mrb[0].mxu0
      %v1254 = vadd.f32 %v1199, %v1253
      %v1255 = vpop.f32.mrb[0].mxu0
      %1256 = vmatprep.mubr.bf16.mxu0 0
      %1257 = vmatmul.mubr.bf16.gmra.mrb[0].mxu0 %v595
      %v1258 = vpop.f32.mrb[0].mxu0
      %v1259 = vadd.f32 %v1199, %v1258
      %v1260 = vpop.f32.mrb[0].mxu0
      %v1261 = vpop.f32.mrb[0].mxu0
      %v1262 = vadd.f32 %v1199, %v1261
      %v1263 = vpop.f32.mrb[0].mxu0
      %1264 = vmatprep.mubr.bf16.mxu0 0
      %1265 = vmatmul.mubr.bf16.gmra.mrb[0].mxu0 %v596
      %v1266 = vpop.f32.mrb[0].mxu0
      %v1267 = vadd.f32 %v1199, %v1266
      %v1268 = vpop.f32.mrb[0].mxu0
      %v1269 = vpop.f32.mrb[0].mxu0
      %v1270 = vadd.f32 %v1199, %v1269
      %v1271 = vpop.f32.mrb[0].mxu0
      %1272 = vmatprep.mubr.bf16.mxu0 0
      %1273 = vmatmul.mubr.bf16.gmra.mrb[0].mxu0 %v597
      %v1274 = vpop.f32.mrb[0].mxu0
      %v1275 = vadd.f32 %v1199, %v1274
      %v1276 = vpop.f32.mrb[0].mxu0
      %v1277 = vpop.f32.mrb[0].mxu0
      %v1278 = vadd.f32 %v1199, %v1277
      %v1279 = vpop.f32.mrb[0].mxu0
      %1280 = vmatprep.mubr.bf16.mxu0 0
      %1281 = vmatmul.mubr.bf16.gmra.mrb[0].mxu0 %v598
      %v1282 = vpop.f32.mrb[0].mxu0
      %v1283 = vadd.f32 %v1199, %v1282
      %v1284 = vpop.f32.mrb[0].mxu0
      %v1285 = vpop.f32.mrb[0].mxu0
      %v1286 = vadd.f32 %v1199, %v1285
      %v1287 = vpop.f32.mrb[0].mxu0
      %1288 = vmatprep.mubr.bf16.mxu0 0
      %1289 = vmatmul.mubr.bf16.gmra.mrb[0].mxu0 %v599
      %v1290 = vpop.f32.mrb[0].mxu0
      %v1291 = vadd.f32 %v1199, %v1290
      %v1292 = vpop.f32.mrb[0].mxu0
      %v1293 = vpop.f32.mrb[0].mxu0
      %v1294 = vadd.f32 %v1199, %v1293
      %v1295 = vpop.f32.mrb[0].mxu0
      %1296 = vdwg.mxu0
      %v1297 = vmax.f32 %v1235, 0.0
      %v1298 = vmax.f32 %v1238, 0.0
      %v1299 = vmax.f32 %v1243, 0.0
      %v1300 = vmax.f32 %v1246, 0.0
      %v1301 = vmax.f32 %v1251, 0.0
      %v1302 = vmax.f32 %v1254, 0.0
      %v1303 = vmax.f32 %v1259, 0.0
      %v1304 = vmax.f32 %v1262, 0.0
      %v1305 = vmax.f32 %v1267, 0.0
      %v1306 = vmax.f32 %v1270, 0.0
      %v1307 = vmax.f32 %v1275, 0.0
      %v1308 = vmax.f32 %v1278, 0.0
      %v1309 = vmax.f32 %v1283, 0.0
      %v1310 = vmax.f32 %v1286, 0.0
      %v1311 = vmax.f32 %v1291, 0.0
      %v1312 = vmax.f32 %v1294, 0.0
      %v1313 = vpack.c.bf16 %v1298, %v1297
      %v1314 = vpack.c.bf16 %v1300, %v1299
      %v1315 = vpack.c.bf16 %v1302, %v1301
      %v1316 = vpack.c.bf16 %v1304, %v1303
      %v1317 = vpack.c.bf16 %v1306, %v1305
      %v1318 = vpack.c.bf16 %v1308, %v1307
      %v1319 = vpack.c.bf16 %v1310, %v1309
      %v1320 = vpack.c.bf16 %v1312, %v1311
      %v1321 = vld [vmem:[%s296] sm:$0xff]
      %v1322 = vpack.c.bf16 %v1321, %v1321
      %1323 = vmatprep.subr.bf16.mxu0 0
      %1324 = vmatpush1.bf16.msra.mxu0 %v1313
      %1325 = vmatprep.subr.bf16.mxu0 0
      %1326 = vmatpush1.bf16.msra.mxu0 %v1314
      %1327 = vmatprep.subr.bf16.mxu0 0
      %1328 = vmatpush1.bf16.msra.mxu0 %v1315
      %1329 = vmatprep.subr.bf16.mxu0 0
      %1330 = vmatpush1.bf16.msra.mxu0 %v1316
      %1331 = vmatprep.subr.bf16.mxu0 0
      %1332 = vmatpush1.bf16.msra.mxu0 %v1317
      %1333 = vmatprep.subr.bf16.mxu0 0
      %1334 = vmatpush1.bf16.msra.mxu0 %v1318
      %1335 = vmatprep.subr.bf16.mxu0 0
      %1336 = vmatpush1.bf16.msra.mxu0 %v1319
      %1337 = vmatprep.subr.bf16.mxu0 0
      %1338 = vmatpush1.bf16.msra.mxu0 %v1320
      %1339 = vmatprep.subr.bf16.mxu0 0
      %1340 = vmatpush1.bf16.msra.mxu0 0
      %1341 = vmatprep.subr.bf16.mxu0 0
      %1342 = vmatpush1.bf16.msra.mxu0 0
      %1343 = vmatprep.subr.bf16.mxu0 0
      %1344 = vmatpush1.bf16.msra.mxu0 0
      %1345 = vmatprep.subr.bf16.mxu0 0
      %1346 = vmatpush1.bf16.msra.mxu0 0
      %1347 = vmatprep.subr.bf16.mxu0 0
      %1348 = vmatpush1.bf16.msra.mxu0 0
      %1349 = vmatprep.subr.bf16.mxu0 0
      %1350 = vmatpush1.bf16.msra.mxu0 0
      %1351 = vmatprep.subr.bf16.mxu0 0
      %1352 = vmatpush1.bf16.msra.mxu0 0
      %1353 = vmatprep.subr.bf16.mxu0 0
      %1354 = vmatpush1.bf16.msra.mxu0 0
      %1355 = vmatprep.mubr.bf16.mxu0 0
      %1356 = vmatmul.mubr.bf16.gmra.mrb[0].mxu0 %v1322
      %v1357 = vpop.f32.mrb[0].mxu0
      %v1358 = vadd.f32 0.0, %v1357
      %v1359 = vpop.f32.mrb[0].mxu0
      %v1360 = vpop.f32.mrb[0].mxu0
      %v1361 = vpop.f32.mrb[0].mxu0
      %1362 = vdwg.mxu0
      %s1363 = sld [smem:[#allocation3 + %s25]]
      %v1364 = vstv %s1363
      %v1365 = vmul.f32 %v1358, %v1364
      %v1366 = vpack.c.bf16 %v1365, %v1365
      %s1367 = scalar_lea.vmem %s4, 192
      %v1368 = vld [vmem:[%s1367] sm:$0xf]
      %v1369 = vld [vmem:[%s1367 + $0x4] sm:$0xf]
      %v1370 = vld [vmem:[%s1367 + $0x8] sm:$0xf]
      %v1371 = vld [vmem:[%s1367 + $0xc] sm:$0xf]
      %v1372 = vld [vmem:[%s1367 + $0x10] sm:$0xf]
      %v1373 = vld [vmem:[%s1367 + $0x14] sm:$0xf]
      %v1374 = vld [vmem:[%s1367 + $0x18] sm:$0xf]
      %v1375 = vld [vmem:[%s1367 + $0x1c] sm:$0xf]
      %v1376 = vld [vmem:[%s1367 + $0x20] sm:$0xf]
      %v1377 = vld [vmem:[%s1367 + $0x24] sm:$0xf]
      %v1378 = vld [vmem:[%s1367 + $0x28] sm:$0xf]
      %v1379 = vld [vmem:[%s1367 + $0x2c] sm:$0xf]
      %v1380 = vld [vmem:[%s1367 + $0x30] sm:$0xf]
      %v1381 = vld [vmem:[%s1367 + $0x34] sm:$0xf]
      %v1382 = vld [vmem:[%s1367 + $0x38] sm:$0xf]
      %v1383 = vld [vmem:[%s1367 + $0x3c] sm:$0xf]
      %v1384 = vld [vmem:[%s5 + $0x3] sm:$0x1]
      %v1385 = vlaneseq
      %v1386 = vshrl.u32 %v1385, 7
      %v1387 = vsub.s32 0, %v1386
      %v1388 = vrot.slane %v1384, %v1387
      %v1405 = vunpack.c.l.b16 %v1368
      %v1406 = vunpack.c.l.b16 %v1369
      %v1407 = vunpack.c.l.b16 %v1370
      %v1408 = vunpack.c.l.b16 %v1371
      %v1409 = vunpack.c.l.b16 %v1372
      %v1410 = vunpack.c.l.b16 %v1373
      %v1411 = vunpack.c.l.b16 %v1374
      %v1412 = vunpack.c.l.b16 %v1375
      %v1413 = vunpack.c.l.b16 %v1376
      %v1414 = vunpack.c.l.b16 %v1377
      %v1415 = vunpack.c.l.b16 %v1378
      %v1416 = vunpack.c.l.b16 %v1379
      %v1417 = vunpack.c.l.b16 %v1380
      %v1418 = vunpack.c.l.b16 %v1381
      %v1419 = vunpack.c.l.b16 %v1382
      %v1420 = vunpack.c.l.b16 %v1383
      %v1421 = vpack.c.b16 %v1406, %v1405
      %v1422 = vpack.c.b16 %v1408, %v1407
      %v1423 = vpack.c.b16 %v1410, %v1409
      %v1424 = vpack.c.b16 %v1412, %v1411
      %v1425 = vpack.c.b16 %v1414, %v1413
      %v1426 = vpack.c.b16 %v1416, %v1415
      %v1427 = vpack.c.b16 %v1418, %v1417
      %v1428 = vpack.c.b16 %v1420, %v1419
      %1437 = vmatprep.subr.bf16.mxu0 0
      %1438 = vmatpush1.bf16.msra.mxu0 %v1421
      %1439 = vmatprep.subr.bf16.mxu0 0
      %1440 = vmatpush1.bf16.msra.mxu0 %v1422
      %1441 = vmatprep.subr.bf16.mxu0 0
      %1442 = vmatpush1.bf16.msra.mxu0 %v1423
      %1443 = vmatprep.subr.bf16.mxu0 0
      %1444 = vmatpush1.bf16.msra.mxu0 %v1424
      %1445 = vmatprep.subr.bf16.mxu0 0
      %1446 = vmatpush1.bf16.msra.mxu0 %v1425
      %1447 = vmatprep.subr.bf16.mxu0 0
      %1448 = vmatpush1.bf16.msra.mxu0 %v1426
      %1449 = vmatprep.subr.bf16.mxu0 0
      %1450 = vmatpush1.bf16.msra.mxu0 %v1427
      %1451 = vmatprep.subr.bf16.mxu0 0
      %1452 = vmatpush1.bf16.msra.mxu0 %v1428
      %1453 = vmatprep.subr.bf16.mxu0 0
      %1454 = vmatpush1.bf16.msra.mxu0 0
      %1455 = vmatprep.subr.bf16.mxu0 0
      %1456 = vmatpush1.bf16.msra.mxu0 0
      %1457 = vmatprep.subr.bf16.mxu0 0
      %1458 = vmatpush1.bf16.msra.mxu0 0
      %1459 = vmatprep.subr.bf16.mxu0 0
      %1460 = vmatpush1.bf16.msra.mxu0 0
      %1461 = vmatprep.subr.bf16.mxu0 0
      %1462 = vmatpush1.bf16.msra.mxu0 0
      %1463 = vmatprep.subr.bf16.mxu0 0
      %1464 = vmatpush1.bf16.msra.mxu0 0
      %1465 = vmatprep.subr.bf16.mxu0 0
      %1466 = vmatpush1.bf16.msra.mxu0 0
      %1467 = vmatprep.subr.bf16.mxu0 0
      %1468 = vmatpush1.bf16.msra.mxu0 0
      %1469 = vmatprep.mubr.bf16.mxu0 0
      %1470 = vmatmul.mubr.bf16.gmra.mrb[0].mxu0 %v1366
      %v1471 = vpop.f32.mrb[0].mxu0
      %v1472 = vadd.f32 %v1388, %v1471
      %v1473 = vpop.f32.mrb[0].mxu0
      %v1474 = vpop.f32.mrb[0].mxu0
      %v1475 = vpop.f32.mrb[0].mxu0
      %1476 = vdwg.mxu0
      %v1477 = vpack.c.bf16 %v1472, %v1472
      %s1478 = scalar_lea.vmem %s4, 256
      %v1479 = vld [vmem:[%s1478] sm:$0xf]
      %v1480 = vld [vmem:[%s1478 + $0x4] sm:$0xf]
      %v1481 = vld [vmem:[%s1478 + $0x8] sm:$0xf]
      %v1482 = vld [vmem:[%s1478 + $0xc] sm:$0xf]
      %v1483 = vld [vmem:[%s1478 + $0x10] sm:$0xf]
      %v1484 = vld [vmem:[%s1478 + $0x14] sm:$0xf]
      %v1485 = vld [vmem:[%s1478 + $0x18] sm:$0xf]
      %v1486 = vld [vmem:[%s1478 + $0x1c] sm:$0xf]
      %v1487 = vld [vmem:[%s1478 + $0x20] sm:$0xf]
      %v1488 = vld [vmem:[%s1478 + $0x24] sm:$0xf]
      %v1489 = vld [vmem:[%s1478 + $0x28] sm:$0xf]
      %v1490 = vld [vmem:[%s1478 + $0x2c] sm:$0xf]
      %v1491 = vld [vmem:[%s1478 + $0x30] sm:$0xf]
      %v1492 = vld [vmem:[%s1478 + $0x34] sm:$0xf]
      %v1493 = vld [vmem:[%s1478 + $0x38] sm:$0xf]
      %v1494 = vld [vmem:[%s1478 + $0x3c] sm:$0xf]
      %v1495 = vld [vmem:[%s5 + $0x4] sm:$0x1]
      %v1496 = vlaneseq
      %v1497 = vshrl.u32 %v1496, 7
      %v1498 = vsub.s32 0, %v1497
      %v1499 = vrot.slane %v1495, %v1498
      %v1516 = vunpack.c.l.b16 %v1479
      %v1517 = vunpack.c.l.b16 %v1480
      %v1518 = vunpack.c.l.b16 %v1481
      %v1519 = vunpack.c.l.b16 %v1482
      %v1520 = vunpack.c.l.b16 %v1483
      %v1521 = vunpack.c.l.b16 %v1484
      %v1522 = vunpack.c.l.b16 %v1485
      %v1523 = vunpack.c.l.b16 %v1486
      %v1524 = vunpack.c.l.b16 %v1487
      %v1525 = vunpack.c.l.b16 %v1488
      %v1526 = vunpack.c.l.b16 %v1489
      %v1527 = vunpack.c.l.b16 %v1490
      %v1528 = vunpack.c.l.b16 %v1491
      %v1529 = vunpack.c.l.b16 %v1492
      %v1530 = vunpack.c.l.b16 %v1493
      %v1531 = vunpack.c.l.b16 %v1494
      %v1532 = vpack.c.b16 %v1517, %v1516
      %v1533 = vpack.c.b16 %v1519, %v1518
      %v1534 = vpack.c.b16 %v1521, %v1520
      %v1535 = vpack.c.b16 %v1523, %v1522
      %v1536 = vpack.c.b16 %v1525, %v1524
      %v1537 = vpack.c.b16 %v1527, %v1526
      %v1538 = vpack.c.b16 %v1529, %v1528
      %v1539 = vpack.c.b16 %v1531, %v1530
      %1548 = vmatprep.subr.bf16.mxu0 0
      %1549 = vmatpush1.bf16.msra.mxu0 %v1532
      %1550 = vmatprep.subr.bf16.mxu0 0
      %1551 = vmatpush1.bf16.msra.mxu0 %v1533
      %1552 = vmatprep.subr.bf16.mxu0 0
      %1553 = vmatpush1.bf16.msra.mxu0 %v1534
      %1554 = vmatprep.subr.bf16.mxu0 0
      %1555 = vmatpush1.bf16.msra.mxu0 %v1535
      %1556 = vmatprep.subr.bf16.mxu0 0
      %1557 = vmatpush1.bf16.msra.mxu0 %v1536
      %1558 = vmatprep.subr.bf16.mxu0 0
      %1559 = vmatpush1.bf16.msra.mxu0 %v1537
      %1560 = vmatprep.subr.bf16.mxu0 0
      %1561 = vmatpush1.bf16.msra.mxu0 %v1538
      %1562 = vmatprep.subr.bf16.mxu0 0
      %1563 = vmatpush1.bf16.msra.mxu0 %v1539
      %1564 = vmatprep.subr.bf16.mxu0 0
      %1565 = vmatpush1.bf16.msra.mxu0 0
      %1566 = vmatprep.subr.bf16.mxu0 0
      %1567 = vmatpush1.bf16.msra.mxu0 0
      %1568 = vmatprep.subr.bf16.mxu0 0
      %1569 = vmatpush1.bf16.msra.mxu0 0
      %1570 = vmatprep.subr.bf16.mxu0 0
      %1571 = vmatpush1.bf16.msra.mxu0 0
      %1572 = vmatprep.subr.bf16.mxu0 0
      %1573 = vmatpush1.bf16.msra.mxu0 0
      %1574 = vmatprep.subr.bf16.mxu0 0
      %1575 = vmatpush1.bf16.msra.mxu0 0
      %1576 = vmatprep.subr.bf16.mxu0 0
      %1577 = vmatpush1.bf16.msra.mxu0 0
      %1578 = vmatprep.subr.bf16.mxu0 0
      %1579 = vmatpush1.bf16.msra.mxu0 0
      %1580 = vmatprep.mubr.bf16.mxu0 0
      %1581 = vmatmul.mubr.bf16.gmra.mrb[0].mxu0 %v1477
      %v1582 = vpop.f32.mrb[0].mxu0
      %v1583 = vadd.f32 %v1499, %v1582
      %v1584 = vpop.f32.mrb[0].mxu0
      %v1585 = vpop.f32.mrb[0].mxu0
      %v1586 = vpop.f32.mrb[0].mxu0
      %1587 = vdwg.mxu0
      %1588 = vst [vmem:[%s304] sm:$0xff] %v1472
      %1589 = vst [vmem:[%s300] sm:$0xff] %v1583
      %p1590 = scmp.lt.s32.totalorder %s25, 1
      %s1591 = scalar_select %p1590, %s25, 1
      %s1592 = smul.addr %s1591, 8
      %s1593 = scalar_lea.vmem %s6, %s1592
      %p1594 = scmp.lt.s32.totalorder %s25, 1
      %s1595 = scalar_select %p1594, %s25, 1
      %s1596 = smul.addr %s1595, 8
      %s1597 = scalar_lea.vmem %s7, %s1596
      // Predicated region
      $region41: #{odor_gnn_forward.1} parent=39 // pred_check
        %p1598 = pneg %p163
      $region42: #{odor_gnn_forward.1} parent=39 // pred_check_branch
        %1600 = sbr.rel (%p1598) target = $region44
      $region43: #{odor_gnn_forward.1} parent=39 // pred_region
        _
      $region44: #{odor_gnn_forward.1} parent=39 // pred_fallthru
        _
      // Predicated region
      $region45: #{odor_gnn_forward.1} parent=39 // pred_check
        %p1601 = pneg %p189
      $region46: #{odor_gnn_forward.1} parent=39 // pred_check_branch
        %1603 = sbr.rel (%p1601) target = $region48
      $region47: #{odor_gnn_forward.1} parent=39 // pred_region
        _
      $region48: #{odor_gnn_forward.1} parent=39 // pred_fallthru
        _
    $region40: #{odor_gnn_forward.1} parent=5 // pred_fallthru
      _
    %p1604 = scmp.le.s32.totalorder 2, %s20
    // Predicated region
    $region49: #{odor_gnn_forward.1} parent=5 // pred_check
      %p1605 = pneg %p1604
    $region50: #{odor_gnn_forward.1} parent=5 // pred_check_branch
      %1607 = sbr.rel (%p1605) target = $region52
    $region51: #{odor_gnn_forward.1} parent=5 // pred_region
      %s1608 = ssub.s32 %s20, 2
      // Predicated region
      $region53: #{odor_gnn_forward.1} parent=51 // pred_check
        %p1609 = pneg %p169
      $region54: #{odor_gnn_forward.1} parent=51 // pred_check_branch
        %1611 = sbr.rel (%p1609) target = $region56
      $region55: #{odor_gnn_forward.1} parent=51 // pred_region
        %p1612 = scmp.lt.s32.totalorder %s26, 1
        %s1613 = scalar_select %p1612, %s26, 1
        %s1614 = smul.addr %s1613, 8
        %s1615 = scalar_lea.vmem %s6, %s1614
      $region56: #{odor_gnn_forward.1} parent=51 // pred_fallthru
        _
      // Predicated region
      $region57: #{odor_gnn_forward.1} parent=51 // pred_check
        %p1616 = pneg %p195
      $region58: #{odor_gnn_forward.1} parent=51 // pred_check_branch
        %1618 = sbr.rel (%p1616) target = $region60
      $region59: #{odor_gnn_forward.1} parent=51 // pred_region
        %p1619 = scmp.lt.s32.totalorder %s26, 1
        %s1620 = scalar_select %p1619, %s26, 1
        %s1621 = smul.addr %s1620, 8
        %s1622 = scalar_lea.vmem %s7, %s1621
      $region60: #{odor_gnn_forward.1} parent=51 // pred_fallthru
        _
    $region52: #{odor_gnn_forward.1} parent=5 // pred_fallthru
      _
  $region6: #{odor_gnn_forward.1} parent=0 // loop_footer
    %s24 = sadd.s32 1, %s20
  $region7: #{odor_gnn_forward.1} parent=0 // loop_footer_branch
    %19 = sbr.rel target = $region3
  $region8: #{odor_gnn_forward.1} parent=0 // loop_exit
    _

</llo_original>
